<compile_context>
chip_gen: v6e
topology: v6e:2x2x1
jax: 0.10.0
libtpu: 0.0.40
codegen_flags: <defaults>
</compile_context>

<pallas_src>
import functools

import jax
import jax.numpy as jnp
from jax.experimental import pallas as pl
from jax.experimental.pallas import tpu as pltpu


def _lstm_fc_kernel(x_ref, *refs, seq_len, num_layers, hidden_size, batch_padded):
    S, L, H, BP = seq_len, num_layers, hidden_size, batch_padded
    *param_refs, out_ref = refs

    w_ih0 = param_refs[0][...]        # (I, 4H)  bf16, gate order [i, f, o, g]
    w_rec0 = param_refs[1][...]       # (H, 4H)  bf16
    b0 = param_refs[2][...]           # (1, 4H)  f32  (= b_ih + b_hh, permuted)
    layer_w = [None]
    layer_b = [None]
    idx = 3
    for _ in range(1, L):
        layer_w.append(param_refs[idx][...])       # (2H, 4H) bf16  [W_ih ; W_hh]
        layer_b.append(param_refs[idx + 1][...])   # (1, 4H)  f32
        idx += 2
    fc_w = param_refs[idx][...]       # (H, OP)  bf16, OP = 128 (zero-padded cols)
    fc_b = param_refs[idx + 1][...]   # (1, OP)  f32

    # Hoisted layer-0 input contribution for the whole sequence, bias folded in.
    pre0 = (jnp.dot(x_ref[...].astype(jnp.bfloat16), w_ih0,
                    preferred_element_type=jnp.float32) + b0)       # (S*BP, 4H) f32

    def lstm_cell(gates, c_prev):
        # One full-vreg sigmoid covers the i/f/o lanes (g lanes discarded); tanh only
        # on the trailing H lanes.  32-lane slices stay in-vreg lane selects.
        sig = jax.nn.sigmoid(gates)
        i_g = sig[:, 0:H]
        f_g = sig[:, H:2 * H]
        o_g = sig[:, 2 * H:3 * H]
        g_g = jnp.tanh(gates[:, 3 * H:4 * H])
        c_new = f_g * c_prev + i_g * g_g
        h_new = o_g * jnp.tanh(c_new)
        return h_new, c_new

    h = [jnp.zeros((BP, H), jnp.float32) for _ in range(L)]
    c = [jnp.zeros((BP, H), jnp.float32) for _ in range(L)]

    # Wavefront over (layer, time): step s runs layer l at time t = s - l.  Every
    # active layer reads only states committed at step s-1, so the per-layer cell
    # updates inside one wavefront step are independent chains.
    for s in range(S + L - 1):
        new_h = list(h)
        new_c = list(c)
        for l in range(L):
            t = s - l
            if not (0 <= t < S):
                continue
            if l == 0:
                gates = pre0[t * BP:(t + 1) * BP, :] + jnp.dot(
                    h[0].astype(jnp.bfloat16), w_rec0,
                    preferred_element_type=jnp.float32)
            else:
                # Fused input + recurrent matmul: [h_below_t | h_l_{t-1}] @ [W_ih ; W_hh].
                lhs = jnp.concatenate(
                    [h[l - 1].astype(jnp.bfloat16), h[l].astype(jnp.bfloat16)],
                    axis=-1)                                        # (BP, 2H) bf16
                gates = jnp.dot(lhs, layer_w[l],
                                preferred_element_type=jnp.float32) + layer_b[l]
            new_h[l], new_c[l] = lstm_cell(gates, c[l])
        h, c = new_h, new_c

    # fc on the last timestep of the top layer; output lanes padded to 128 so this is
    # a single unmasked store.
    out_ref[...] = (jnp.dot(h[L - 1].astype(jnp.bfloat16), fc_w,
                            preferred_element_type=jnp.float32) + fc_b)


def estimation_lstm_forward(x, params, *, hidden_size, num_layers):
    B, S, I = x.shape
    H = hidden_size
    O = params["fc_w"].shape[1]
    BP = ((B + 7) // 8) * 8                      # pad each timestep to full sublane tiles
    OP = ((O + 127) // 128) * 128                # pad fc output lanes -> unmasked store

    def permute_gates(w):
        # PyTorch gate order [i, f, g, o] -> kernel order [i, f, o, g] on the last axis.
        return jnp.concatenate(
            [w[..., 0:2 * H], w[..., 3 * H:4 * H], w[..., 2 * H:3 * H]], axis=-1)

    flat = []
    # Layer 0: input matmul hoisted over the sequence; recurrent weight kept separate.
    flat.append(permute_gates(params["w_ih_0"]).astype(jnp.bfloat16))
    flat.append(permute_gates(params["w_hh_0"]).astype(jnp.bfloat16))
    flat.append(permute_gates(params["b_0"]))                       # keep bias in f32
    # Layers >= 1: stack [W_ih ; W_hh] on K for the per-step fused matmul.
    for l in range(1, num_layers):
        w_comb = jnp.concatenate(
            [permute_gates(params[f"w_ih_{l}"]), permute_gates(params[f"w_hh_{l}"])],
            axis=0)
        flat.append(w_comb.astype(jnp.bfloat16))
        flat.append(permute_gates(params[f"b_{l}"]))                # f32
    fc_w = jnp.zeros((H, OP), jnp.float32).at[:, :O].set(params["fc_w"])
    fc_b = jnp.zeros((1, OP), jnp.float32).at[:, :O].set(params["fc_b"])
    flat.append(fc_w.astype(jnp.bfloat16))
    flat.append(fc_b)

    # Time-major slab; each timestep occupies a full BP-row tile (rows t*BP..t*BP+B-1 valid).
    x_t = jnp.transpose(x, (1, 0, 2))                               # (S, B, I)
    x_t = jnp.pad(x_t, ((0, 0), (0, BP - B), (0, 0)))               # (S, BP, I)
    x_slab = x_t.reshape(S * BP, I)

    kernel = functools.partial(_lstm_fc_kernel, seq_len=S, num_layers=num_layers,
                               hidden_size=H, batch_padded=BP)
    vmem = pl.BlockSpec(memory_space=pltpu.MemorySpace.VMEM)
    out = pl.pallas_call(
        kernel,
        out_shape=jax.ShapeDtypeStruct((BP, OP), jnp.float32),
        in_specs=[vmem] * (1 + len(flat)),
        out_specs=vmem,
    )(x_slab, *flat)
    return out[:B, :O]


def init_params(key, input_size, hidden_size, output_size, num_layers):
    """Deterministic uniform(-1/sqrt(H), 1/sqrt(H)) init, matching nn.LSTM / nn.Linear.

    Weights are stored transposed as (in_features, 4H) with PyTorch gate order
    [i, f, g, o]; the wrapper permutes / stacks / casts them for the kernel.
    """
    params = {}
    bound = 1.0 / jnp.sqrt(jnp.float32(hidden_size))
    for l in range(num_layers):
        in_l = input_size if l == 0 else hidden_size
        key, k1, k2, k3, k4 = jax.random.split(key, 5)
        params[f"w_ih_{l}"] = jax.random.uniform(k1, (in_l, 4 * hidden_size),
                                                 jnp.float32, -bound, bound)
        params[f"w_hh_{l}"] = jax.random.uniform(k2, (hidden_size, 4 * hidden_size),
                                                 jnp.float32, -bound, bound)
        b_ih = jax.random.uniform(k3, (1, 4 * hidden_size), jnp.float32, -bound, bound)
        b_hh = jax.random.uniform(k4, (1, 4 * hidden_size), jnp.float32, -bound, bound)
        params[f"b_{l}"] = b_ih + b_hh
    key, k1, k2 = jax.random.split(key, 3)
    fc_bound = 1.0 / jnp.sqrt(jnp.float32(hidden_size))
    params["fc_w"] = jax.random.uniform(k1, (hidden_size, output_size),
                                        jnp.float32, -fc_bound, fc_bound)
    params["fc_b"] = jax.random.uniform(k2, (1, output_size),
                                        jnp.float32, -fc_bound, fc_bound)
    # fc1 / fc2 exist in __init__ but are unused in forward, so they are omitted.
    return params


def reference_forward(x, params, *, hidden_size, num_layers):
    """Pure-JAX f32 reference reproducing PyTorch LSTM + Linear semantics."""
    B, S, _ = x.shape
    H = hidden_size
    layer_in = x
    h = jnp.zeros((B, H), jnp.float32)
    for l in range(num_layers):
        w_ih, w_hh, b = params[f"w_ih_{l}"], params[f"w_hh_{l}"], params[f"b_{l}"]
        h = jnp.zeros((B, H), jnp.float32)
        c = jnp.zeros((B, H), jnp.float32)
        outs = []
        for t in range(S):
            gates = layer_in[:, t, :] @ w_ih + h @ w_hh + b
            i_g = jax.nn.sigmoid(gates[:, 0:H])
            f_g = jax.nn.sigmoid(gates[:, H:2 * H])
            g_g = jnp.tanh(gates[:, 2 * H:3 * H])
            o_g = jax.nn.sigmoid(gates[:, 3 * H:4 * H])
            c = f_g * c + i_g * g_g
            h = o_g * jnp.tanh(c)
            outs.append(h)
        layer_in = jnp.stack(outs, axis=1)
    return h @ params["fc_w"] + params["fc_b"]


if __name__ == "__main__":
    input_size, hidden_size, output_size = 4, 32, 3
    seq_len, num_layers, batch = 8, 2, 2

    key = jax.random.PRNGKey(0)
    key, xk = jax.random.split(key)
    x = jax.random.normal(xk, (batch, seq_len, input_size), jnp.float32)
    params = init_params(key, input_size, hidden_size, output_size, num_layers)

    out = estimation_lstm_forward(x, params, hidden_size=hidden_size,
                                  num_layers=num_layers)
    out = jax.block_until_ready(out)

    ref = reference_forward(x, params, hidden_size=hidden_size,
                            num_layers=num_layers)
    assert out.shape == (batch, output_size)
    # bf16 MXU operands (f32 accumulation / f32 state) -> relaxed tolerance.
    assert jnp.allclose(out, ref, atol=2e-2, rtol=2e-2)
    print("KERNEL_OK")
</pallas_src>

<mosaic_0001>
module attributes {stable_mosaic.version = 11 : i64} {
  func.func @_lstm_fc_kernel(%arg0: memref<64x4xf32, #tpu.memory_space<vmem>>, %arg1: memref<4x128xbf16, #tpu.memory_space<vmem>>, %arg2: memref<32x128xbf16, #tpu.memory_space<vmem>>, %arg3: memref<1x128xf32, #tpu.memory_space<vmem>>, %arg4: memref<64x128xbf16, #tpu.memory_space<vmem>>, %arg5: memref<1x128xf32, #tpu.memory_space<vmem>>, %arg6: memref<32x128xbf16, #tpu.memory_space<vmem>>, %arg7: memref<1x128xf32, #tpu.memory_space<vmem>>, %arg8: memref<8x128xf32, #tpu.memory_space<vmem>>) attributes {dimension_semantics = [], scalar_prefetch = 0 : i64, scratch_operands = 0 : i64, tpu.core_type = #tpu.core_type<tc>} {
    %c0 = arith.constant 0 : index
    %c0_0 = arith.constant 0 : index
    %0 = vector.load %arg1[%c0, %c0_0] : memref<4x128xbf16, #tpu.memory_space<vmem>>, vector<4x128xbf16>
    %c0_1 = arith.constant 0 : index
    %c0_2 = arith.constant 0 : index
    %1 = vector.load %arg2[%c0_1, %c0_2] : memref<32x128xbf16, #tpu.memory_space<vmem>>, vector<32x128xbf16>
    %c0_3 = arith.constant 0 : index
    %c0_4 = arith.constant 0 : index
    %2 = vector.load %arg3[%c0_3, %c0_4] : memref<1x128xf32, #tpu.memory_space<vmem>>, vector<1x128xf32>
    %c0_5 = arith.constant 0 : index
    %c0_6 = arith.constant 0 : index
    %3 = vector.load %arg4[%c0_5, %c0_6] : memref<64x128xbf16, #tpu.memory_space<vmem>>, vector<64x128xbf16>
    %c0_7 = arith.constant 0 : index
    %c0_8 = arith.constant 0 : index
    %4 = vector.load %arg5[%c0_7, %c0_8] : memref<1x128xf32, #tpu.memory_space<vmem>>, vector<1x128xf32>
    %c0_9 = arith.constant 0 : index
    %c0_10 = arith.constant 0 : index
    %5 = vector.load %arg6[%c0_9, %c0_10] : memref<32x128xbf16, #tpu.memory_space<vmem>>, vector<32x128xbf16>
    %c0_11 = arith.constant 0 : index
    %c0_12 = arith.constant 0 : index
    %6 = vector.load %arg7[%c0_11, %c0_12] : memref<1x128xf32, #tpu.memory_space<vmem>>, vector<1x128xf32>
    %c0_13 = arith.constant 0 : index
    %c0_14 = arith.constant 0 : index
    %7 = vector.load %arg0[%c0_13, %c0_14] : memref<64x4xf32, #tpu.memory_space<vmem>>, vector<64x4xf32>
    %8 = arith.truncf %7 : vector<64x4xf32> to vector<64x4xbf16>
    %cst = arith.constant dense<0.000000e+00> : vector<64x128xf32>
    %9 = tpu.matmul %8, %0, %cst {dimension_numbers = #tpu.dot_dimension_numbers<[1], [0], [0], [1], [0, 0, 1, 1], [], []>} : vector<64x4xbf16>, vector<4x128xbf16>, vector<64x128xf32> -> vector<64x128xf32>
    %10 = vector.broadcast %2 : vector<1x128xf32> to vector<64x128xf32>
    %11 = arith.addf %9, %10 : vector<64x128xf32>
    %cst_15 = arith.constant 0.000000e+00 : f32
    %12 = vector.broadcast %cst_15 : f32 to vector<8x32xf32>
    %cst_16 = arith.constant 0.000000e+00 : f32
    %13 = vector.broadcast %cst_16 : f32 to vector<8x32xf32>
    %cst_17 = arith.constant 0.000000e+00 : f32
    %14 = vector.broadcast %cst_17 : f32 to vector<8x32xf32>
    %cst_18 = arith.constant 0.000000e+00 : f32
    %15 = vector.broadcast %cst_18 : f32 to vector<8x32xf32>
    %16 = vector.extract_strided_slice %11 {offsets = [0, 0], sizes = [8, 128], strides = [1, 1]} : vector<64x128xf32> to vector<8x128xf32>
    %17 = arith.truncf %12 : vector<8x32xf32> to vector<8x32xbf16>
    %cst_19 = arith.constant dense<0.000000e+00> : vector<8x128xf32>
    %18 = tpu.matmul %17, %1, %cst_19 {dimension_numbers = #tpu.dot_dimension_numbers<[1], [0], [0], [1], [0, 0, 1, 1], [], []>} : vector<8x32xbf16>, vector<32x128xbf16>, vector<8x128xf32> -> vector<8x128xf32>
    %19 = arith.addf %16, %18 : vector<8x128xf32>
    %20 = arith.negf %19 : vector<8x128xf32>
    %21 = math.exp %20 : vector<8x128xf32>
    %cst_20 = arith.constant 1.000000e+00 : f32
    %22 = vector.broadcast %cst_20 : f32 to vector<8x128xf32>
    %23 = arith.addf %22, %21 : vector<8x128xf32>
    %24 = arith.divf %22, %23 : vector<8x128xf32>
    %25 = vector.extract_strided_slice %24 {offsets = [0, 0], sizes = [8, 32], strides = [1, 1]} : vector<8x128xf32> to vector<8x32xf32>
    %26 = vector.extract_strided_slice %24 {offsets = [0, 32], sizes = [8, 32], strides = [1, 1]} : vector<8x128xf32> to vector<8x32xf32>
    %27 = vector.extract_strided_slice %24 {offsets = [0, 64], sizes = [8, 32], strides = [1, 1]} : vector<8x128xf32> to vector<8x32xf32>
    %28 = vector.extract_strided_slice %19 {offsets = [0, 96], sizes = [8, 32], strides = [1, 1]} : vector<8x128xf32> to vector<8x32xf32>
    %29 = math.tanh %28 : vector<8x32xf32>
    %30 = arith.mulf %26, %14 : vector<8x32xf32>
    %31 = arith.mulf %25, %29 : vector<8x32xf32>
    %32 = arith.addf %30, %31 : vector<8x32xf32>
    %33 = math.tanh %32 : vector<8x32xf32>
    %34 = arith.mulf %27, %33 : vector<8x32xf32>
    %35 = vector.extract_strided_slice %11 {offsets = [8, 0], sizes = [8, 128], strides = [1, 1]} : vector<64x128xf32> to vector<8x128xf32>
    %36 = arith.truncf %34 : vector<8x32xf32> to vector<8x32xbf16>
    %cst_21 = arith.constant dense<0.000000e+00> : vector<8x128xf32>
    %37 = tpu.matmul %36, %1, %cst_21 {dimension_numbers = #tpu.dot_dimension_numbers<[1], [0], [0], [1], [0, 0, 1, 1], [], []>} : vector<8x32xbf16>, vector<32x128xbf16>, vector<8x128xf32> -> vector<8x128xf32>
    %38 = arith.addf %35, %37 : vector<8x128xf32>
    %39 = arith.negf %38 : vector<8x128xf32>
    %40 = math.exp %39 : vector<8x128xf32>
    %cst_22 = arith.constant 1.000000e+00 : f32
    %41 = vector.broadcast %cst_22 : f32 to vector<8x128xf32>
    %42 = arith.addf %41, %40 : vector<8x128xf32>
    %43 = arith.divf %41, %42 : vector<8x128xf32>
    %44 = vector.extract_strided_slice %43 {offsets = [0, 0], sizes = [8, 32], strides = [1, 1]} : vector<8x128xf32> to vector<8x32xf32>
    %45 = vector.extract_strided_slice %43 {offsets = [0, 32], sizes = [8, 32], strides = [1, 1]} : vector<8x128xf32> to vector<8x32xf32>
    %46 = vector.extract_strided_slice %43 {offsets = [0, 64], sizes = [8, 32], strides = [1, 1]} : vector<8x128xf32> to vector<8x32xf32>
    %47 = vector.extract_strided_slice %38 {offsets = [0, 96], sizes = [8, 32], strides = [1, 1]} : vector<8x128xf32> to vector<8x32xf32>
    %48 = math.tanh %47 : vector<8x32xf32>
    %49 = arith.mulf %45, %32 : vector<8x32xf32>
    %50 = arith.mulf %44, %48 : vector<8x32xf32>
    %51 = arith.addf %49, %50 : vector<8x32xf32>
    %52 = math.tanh %51 : vector<8x32xf32>
    %53 = arith.mulf %46, %52 : vector<8x32xf32>
    %54 = arith.truncf %34 : vector<8x32xf32> to vector<8x32xbf16>
    %55 = arith.truncf %13 : vector<8x32xf32> to vector<8x32xbf16>
    %56 = tpu.concatenate %54, %55 in 1 : vector<8x32xbf16>, vector<8x32xbf16> -> vector<8x64xbf16>
    %cst_23 = arith.constant dense<0.000000e+00> : vector<8x128xf32>
    %57 = tpu.matmul %56, %3, %cst_23 {dimension_numbers = #tpu.dot_dimension_numbers<[1], [0], [0], [1], [0, 0, 1, 1], [], []>} : vector<8x64xbf16>, vector<64x128xbf16>, vector<8x128xf32> -> vector<8x128xf32>
    %58 = vector.broadcast %4 : vector<1x128xf32> to vector<8x128xf32>
    %59 = arith.addf %57, %58 : vector<8x128xf32>
    %60 = arith.negf %59 : vector<8x128xf32>
    %61 = math.exp %60 : vector<8x128xf32>
    %cst_24 = arith.constant 1.000000e+00 : f32
    %62 = vector.broadcast %cst_24 : f32 to vector<8x128xf32>
    %63 = arith.addf %62, %61 : vector<8x128xf32>
    %64 = arith.divf %62, %63 : vector<8x128xf32>
    %65 = vector.extract_strided_slice %64 {offsets = [0, 0], sizes = [8, 32], strides = [1, 1]} : vector<8x128xf32> to vector<8x32xf32>
    %66 = vector.extract_strided_slice %64 {offsets = [0, 32], sizes = [8, 32], strides = [1, 1]} : vector<8x128xf32> to vector<8x32xf32>
    %67 = vector.extract_strided_slice %64 {offsets = [0, 64], sizes = [8, 32], strides = [1, 1]} : vector<8x128xf32> to vector<8x32xf32>
    %68 = vector.extract_strided_slice %59 {offsets = [0, 96], sizes = [8, 32], strides = [1, 1]} : vector<8x128xf32> to vector<8x32xf32>
    %69 = math.tanh %68 : vector<8x32xf32>
    %70 = arith.mulf %66, %15 : vector<8x32xf32>
    %71 = arith.mulf %65, %69 : vector<8x32xf32>
    %72 = arith.addf %70, %71 : vector<8x32xf32>
    %73 = math.tanh %72 : vector<8x32xf32>
    %74 = arith.mulf %67, %73 : vector<8x32xf32>
    %75 = vector.extract_strided_slice %11 {offsets = [16, 0], sizes = [8, 128], strides = [1, 1]} : vector<64x128xf32> to vector<8x128xf32>
    %76 = arith.truncf %53 : vector<8x32xf32> to vector<8x32xbf16>
    %cst_25 = arith.constant dense<0.000000e+00> : vector<8x128xf32>
    %77 = tpu.matmul %76, %1, %cst_25 {dimension_numbers = #tpu.dot_dimension_numbers<[1], [0], [0], [1], [0, 0, 1, 1], [], []>} : vector<8x32xbf16>, vector<32x128xbf16>, vector<8x128xf32> -> vector<8x128xf32>
    %78 = arith.addf %75, %77 : vector<8x128xf32>
    %79 = arith.negf %78 : vector<8x128xf32>
    %80 = math.exp %79 : vector<8x128xf32>
    %cst_26 = arith.constant 1.000000e+00 : f32
    %81 = vector.broadcast %cst_26 : f32 to vector<8x128xf32>
    %82 = arith.addf %81, %80 : vector<8x128xf32>
    %83 = arith.divf %81, %82 : vector<8x128xf32>
    %84 = vector.extract_strided_slice %83 {offsets = [0, 0], sizes = [8, 32], strides = [1, 1]} : vector<8x128xf32> to vector<8x32xf32>
    %85 = vector.extract_strided_slice %83 {offsets = [0, 32], sizes = [8, 32], strides = [1, 1]} : vector<8x128xf32> to vector<8x32xf32>
    %86 = vector.extract_strided_slice %83 {offsets = [0, 64], sizes = [8, 32], strides = [1, 1]} : vector<8x128xf32> to vector<8x32xf32>
    %87 = vector.extract_strided_slice %78 {offsets = [0, 96], sizes = [8, 32], strides = [1, 1]} : vector<8x128xf32> to vector<8x32xf32>
    %88 = math.tanh %87 : vector<8x32xf32>
    %89 = arith.mulf %85, %51 : vector<8x32xf32>
    %90 = arith.mulf %84, %88 : vector<8x32xf32>
    %91 = arith.addf %89, %90 : vector<8x32xf32>
    %92 = math.tanh %91 : vector<8x32xf32>
    %93 = arith.mulf %86, %92 : vector<8x32xf32>
    %94 = arith.truncf %53 : vector<8x32xf32> to vector<8x32xbf16>
    %95 = arith.truncf %74 : vector<8x32xf32> to vector<8x32xbf16>
    %96 = tpu.concatenate %94, %95 in 1 : vector<8x32xbf16>, vector<8x32xbf16> -> vector<8x64xbf16>
    %cst_27 = arith.constant dense<0.000000e+00> : vector<8x128xf32>
    %97 = tpu.matmul %96, %3, %cst_27 {dimension_numbers = #tpu.dot_dimension_numbers<[1], [0], [0], [1], [0, 0, 1, 1], [], []>} : vector<8x64xbf16>, vector<64x128xbf16>, vector<8x128xf32> -> vector<8x128xf32>
    %98 = vector.broadcast %4 : vector<1x128xf32> to vector<8x128xf32>
    %99 = arith.addf %97, %98 : vector<8x128xf32>
    %100 = arith.negf %99 : vector<8x128xf32>
    %101 = math.exp %100 : vector<8x128xf32>
    %cst_28 = arith.constant 1.000000e+00 : f32
    %102 = vector.broadcast %cst_28 : f32 to vector<8x128xf32>
    %103 = arith.addf %102, %101 : vector<8x128xf32>
    %104 = arith.divf %102, %103 : vector<8x128xf32>
    %105 = vector.extract_strided_slice %104 {offsets = [0, 0], sizes = [8, 32], strides = [1, 1]} : vector<8x128xf32> to vector<8x32xf32>
    %106 = vector.extract_strided_slice %104 {offsets = [0, 32], sizes = [8, 32], strides = [1, 1]} : vector<8x128xf32> to vector<8x32xf32>
    %107 = vector.extract_strided_slice %104 {offsets = [0, 64], sizes = [8, 32], strides = [1, 1]} : vector<8x128xf32> to vector<8x32xf32>
    %108 = vector.extract_strided_slice %99 {offsets = [0, 96], sizes = [8, 32], strides = [1, 1]} : vector<8x128xf32> to vector<8x32xf32>
    %109 = math.tanh %108 : vector<8x32xf32>
    %110 = arith.mulf %106, %72 : vector<8x32xf32>
    %111 = arith.mulf %105, %109 : vector<8x32xf32>
    %112 = arith.addf %110, %111 : vector<8x32xf32>
    %113 = math.tanh %112 : vector<8x32xf32>
    %114 = arith.mulf %107, %113 : vector<8x32xf32>
    %115 = vector.extract_strided_slice %11 {offsets = [24, 0], sizes = [8, 128], strides = [1, 1]} : vector<64x128xf32> to vector<8x128xf32>
    %116 = arith.truncf %93 : vector<8x32xf32> to vector<8x32xbf16>
    %cst_29 = arith.constant dense<0.000000e+00> : vector<8x128xf32>
    %117 = tpu.matmul %116, %1, %cst_29 {dimension_numbers = #tpu.dot_dimension_numbers<[1], [0], [0], [1], [0, 0, 1, 1], [], []>} : vector<8x32xbf16>, vector<32x128xbf16>, vector<8x128xf32> -> vector<8x128xf32>
    %118 = arith.addf %115, %117 : vector<8x128xf32>
    %119 = arith.negf %118 : vector<8x128xf32>
    %120 = math.exp %119 : vector<8x128xf32>
    %cst_30 = arith.constant 1.000000e+00 : f32
    %121 = vector.broadcast %cst_30 : f32 to vector<8x128xf32>
    %122 = arith.addf %121, %120 : vector<8x128xf32>
    %123 = arith.divf %121, %122 : vector<8x128xf32>
    %124 = vector.extract_strided_slice %123 {offsets = [0, 0], sizes = [8, 32], strides = [1, 1]} : vector<8x128xf32> to vector<8x32xf32>
    %125 = vector.extract_strided_slice %123 {offsets = [0, 32], sizes = [8, 32], strides = [1, 1]} : vector<8x128xf32> to vector<8x32xf32>
    %126 = vector.extract_strided_slice %123 {offsets = [0, 64], sizes = [8, 32], strides = [1, 1]} : vector<8x128xf32> to vector<8x32xf32>
    %127 = vector.extract_strided_slice %118 {offsets = [0, 96], sizes = [8, 32], strides = [1, 1]} : vector<8x128xf32> to vector<8x32xf32>
    %128 = math.tanh %127 : vector<8x32xf32>
    %129 = arith.mulf %125, %91 : vector<8x32xf32>
    %130 = arith.mulf %124, %128 : vector<8x32xf32>
    %131 = arith.addf %129, %130 : vector<8x32xf32>
    %132 = math.tanh %131 : vector<8x32xf32>
    %133 = arith.mulf %126, %132 : vector<8x32xf32>
    %134 = arith.truncf %93 : vector<8x32xf32> to vector<8x32xbf16>
    %135 = arith.truncf %114 : vector<8x32xf32> to vector<8x32xbf16>
    %136 = tpu.concatenate %134, %135 in 1 : vector<8x32xbf16>, vector<8x32xbf16> -> vector<8x64xbf16>
    %cst_31 = arith.constant dense<0.000000e+00> : vector<8x128xf32>
    %137 = tpu.matmul %136, %3, %cst_31 {dimension_numbers = #tpu.dot_dimension_numbers<[1], [0], [0], [1], [0, 0, 1, 1], [], []>} : vector<8x64xbf16>, vector<64x128xbf16>, vector<8x128xf32> -> vector<8x128xf32>
    %138 = vector.broadcast %4 : vector<1x128xf32> to vector<8x128xf32>
    %139 = arith.addf %137, %138 : vector<8x128xf32>
    %140 = arith.negf %139 : vector<8x128xf32>
    %141 = math.exp %140 : vector<8x128xf32>
    %cst_32 = arith.constant 1.000000e+00 : f32
    %142 = vector.broadcast %cst_32 : f32 to vector<8x128xf32>
    %143 = arith.addf %142, %141 : vector<8x128xf32>
    %144 = arith.divf %142, %143 : vector<8x128xf32>
    %145 = vector.extract_strided_slice %144 {offsets = [0, 0], sizes = [8, 32], strides = [1, 1]} : vector<8x128xf32> to vector<8x32xf32>
    %146 = vector.extract_strided_slice %144 {offsets = [0, 32], sizes = [8, 32], strides = [1, 1]} : vector<8x128xf32> to vector<8x32xf32>
    %147 = vector.extract_strided_slice %144 {offsets = [0, 64], sizes = [8, 32], strides = [1, 1]} : vector<8x128xf32> to vector<8x32xf32>
    %148 = vector.extract_strided_slice %139 {offsets = [0, 96], sizes = [8, 32], strides = [1, 1]} : vector<8x128xf32> to vector<8x32xf32>
    %149 = math.tanh %148 : vector<8x32xf32>
    %150 = arith.mulf %146, %112 : vector<8x32xf32>
    %151 = arith.mulf %145, %149 : vector<8x32xf32>
    %152 = arith.addf %150, %151 : vector<8x32xf32>
    %153 = math.tanh %152 : vector<8x32xf32>
    %154 = arith.mulf %147, %153 : vector<8x32xf32>
    %155 = vector.extract_strided_slice %11 {offsets = [32, 0], sizes = [8, 128], strides = [1, 1]} : vector<64x128xf32> to vector<8x128xf32>
    %156 = arith.truncf %133 : vector<8x32xf32> to vector<8x32xbf16>
    %cst_33 = arith.constant dense<0.000000e+00> : vector<8x128xf32>
    %157 = tpu.matmul %156, %1, %cst_33 {dimension_numbers = #tpu.dot_dimension_numbers<[1], [0], [0], [1], [0, 0, 1, 1], [], []>} : vector<8x32xbf16>, vector<32x128xbf16>, vector<8x128xf32> -> vector<8x128xf32>
    %158 = arith.addf %155, %157 : vector<8x128xf32>
    %159 = arith.negf %158 : vector<8x128xf32>
    %160 = math.exp %159 : vector<8x128xf32>
    %cst_34 = arith.constant 1.000000e+00 : f32
    %161 = vector.broadcast %cst_34 : f32 to vector<8x128xf32>
    %162 = arith.addf %161, %160 : vector<8x128xf32>
    %163 = arith.divf %161, %162 : vector<8x128xf32>
    %164 = vector.extract_strided_slice %163 {offsets = [0, 0], sizes = [8, 32], strides = [1, 1]} : vector<8x128xf32> to vector<8x32xf32>
    %165 = vector.extract_strided_slice %163 {offsets = [0, 32], sizes = [8, 32], strides = [1, 1]} : vector<8x128xf32> to vector<8x32xf32>
    %166 = vector.extract_strided_slice %163 {offsets = [0, 64], sizes = [8, 32], strides = [1, 1]} : vector<8x128xf32> to vector<8x32xf32>
    %167 = vector.extract_strided_slice %158 {offsets = [0, 96], sizes = [8, 32], strides = [1, 1]} : vector<8x128xf32> to vector<8x32xf32>
    %168 = math.tanh %167 : vector<8x32xf32>
    %169 = arith.mulf %165, %131 : vector<8x32xf32>
    %170 = arith.mulf %164, %168 : vector<8x32xf32>
    %171 = arith.addf %169, %170 : vector<8x32xf32>
    %172 = math.tanh %171 : vector<8x32xf32>
    %173 = arith.mulf %166, %172 : vector<8x32xf32>
    %174 = arith.truncf %133 : vector<8x32xf32> to vector<8x32xbf16>
    %175 = arith.truncf %154 : vector<8x32xf32> to vector<8x32xbf16>
    %176 = tpu.concatenate %174, %175 in 1 : vector<8x32xbf16>, vector<8x32xbf16> -> vector<8x64xbf16>
    %cst_35 = arith.constant dense<0.000000e+00> : vector<8x128xf32>
    %177 = tpu.matmul %176, %3, %cst_35 {dimension_numbers = #tpu.dot_dimension_numbers<[1], [0], [0], [1], [0, 0, 1, 1], [], []>} : vector<8x64xbf16>, vector<64x128xbf16>, vector<8x128xf32> -> vector<8x128xf32>
    %178 = vector.broadcast %4 : vector<1x128xf32> to vector<8x128xf32>
    %179 = arith.addf %177, %178 : vector<8x128xf32>
    %180 = arith.negf %179 : vector<8x128xf32>
    %181 = math.exp %180 : vector<8x128xf32>
    %cst_36 = arith.constant 1.000000e+00 : f32
    %182 = vector.broadcast %cst_36 : f32 to vector<8x128xf32>
    %183 = arith.addf %182, %181 : vector<8x128xf32>
    %184 = arith.divf %182, %183 : vector<8x128xf32>
    %185 = vector.extract_strided_slice %184 {offsets = [0, 0], sizes = [8, 32], strides = [1, 1]} : vector<8x128xf32> to vector<8x32xf32>
    %186 = vector.extract_strided_slice %184 {offsets = [0, 32], sizes = [8, 32], strides = [1, 1]} : vector<8x128xf32> to vector<8x32xf32>
    %187 = vector.extract_strided_slice %184 {offsets = [0, 64], sizes = [8, 32], strides = [1, 1]} : vector<8x128xf32> to vector<8x32xf32>
    %188 = vector.extract_strided_slice %179 {offsets = [0, 96], sizes = [8, 32], strides = [1, 1]} : vector<8x128xf32> to vector<8x32xf32>
    %189 = math.tanh %188 : vector<8x32xf32>
    %190 = arith.mulf %186, %152 : vector<8x32xf32>
    %191 = arith.mulf %185, %189 : vector<8x32xf32>
    %192 = arith.addf %190, %191 : vector<8x32xf32>
    %193 = math.tanh %192 : vector<8x32xf32>
    %194 = arith.mulf %187, %193 : vector<8x32xf32>
    %195 = vector.extract_strided_slice %11 {offsets = [40, 0], sizes = [8, 128], strides = [1, 1]} : vector<64x128xf32> to vector<8x128xf32>
    %196 = arith.truncf %173 : vector<8x32xf32> to vector<8x32xbf16>
    %cst_37 = arith.constant dense<0.000000e+00> : vector<8x128xf32>
    %197 = tpu.matmul %196, %1, %cst_37 {dimension_numbers = #tpu.dot_dimension_numbers<[1], [0], [0], [1], [0, 0, 1, 1], [], []>} : vector<8x32xbf16>, vector<32x128xbf16>, vector<8x128xf32> -> vector<8x128xf32>
    %198 = arith.addf %195, %197 : vector<8x128xf32>
    %199 = arith.negf %198 : vector<8x128xf32>
    %200 = math.exp %199 : vector<8x128xf32>
    %cst_38 = arith.constant 1.000000e+00 : f32
    %201 = vector.broadcast %cst_38 : f32 to vector<8x128xf32>
    %202 = arith.addf %201, %200 : vector<8x128xf32>
    %203 = arith.divf %201, %202 : vector<8x128xf32>
    %204 = vector.extract_strided_slice %203 {offsets = [0, 0], sizes = [8, 32], strides = [1, 1]} : vector<8x128xf32> to vector<8x32xf32>
    %205 = vector.extract_strided_slice %203 {offsets = [0, 32], sizes = [8, 32], strides = [1, 1]} : vector<8x128xf32> to vector<8x32xf32>
    %206 = vector.extract_strided_slice %203 {offsets = [0, 64], sizes = [8, 32], strides = [1, 1]} : vector<8x128xf32> to vector<8x32xf32>
    %207 = vector.extract_strided_slice %198 {offsets = [0, 96], sizes = [8, 32], strides = [1, 1]} : vector<8x128xf32> to vector<8x32xf32>
    %208 = math.tanh %207 : vector<8x32xf32>
    %209 = arith.mulf %205, %171 : vector<8x32xf32>
    %210 = arith.mulf %204, %208 : vector<8x32xf32>
    %211 = arith.addf %209, %210 : vector<8x32xf32>
    %212 = math.tanh %211 : vector<8x32xf32>
    %213 = arith.mulf %206, %212 : vector<8x32xf32>
    %214 = arith.truncf %173 : vector<8x32xf32> to vector<8x32xbf16>
    %215 = arith.truncf %194 : vector<8x32xf32> to vector<8x32xbf16>
    %216 = tpu.concatenate %214, %215 in 1 : vector<8x32xbf16>, vector<8x32xbf16> -> vector<8x64xbf16>
    %cst_39 = arith.constant dense<0.000000e+00> : vector<8x128xf32>
    %217 = tpu.matmul %216, %3, %cst_39 {dimension_numbers = #tpu.dot_dimension_numbers<[1], [0], [0], [1], [0, 0, 1, 1], [], []>} : vector<8x64xbf16>, vector<64x128xbf16>, vector<8x128xf32> -> vector<8x128xf32>
    %218 = vector.broadcast %4 : vector<1x128xf32> to vector<8x128xf32>
    %219 = arith.addf %217, %218 : vector<8x128xf32>
    %220 = arith.negf %219 : vector<8x128xf32>
    %221 = math.exp %220 : vector<8x128xf32>
    %cst_40 = arith.constant 1.000000e+00 : f32
    %222 = vector.broadcast %cst_40 : f32 to vector<8x128xf32>
    %223 = arith.addf %222, %221 : vector<8x128xf32>
    %224 = arith.divf %222, %223 : vector<8x128xf32>
    %225 = vector.extract_strided_slice %224 {offsets = [0, 0], sizes = [8, 32], strides = [1, 1]} : vector<8x128xf32> to vector<8x32xf32>
    %226 = vector.extract_strided_slice %224 {offsets = [0, 32], sizes = [8, 32], strides = [1, 1]} : vector<8x128xf32> to vector<8x32xf32>
    %227 = vector.extract_strided_slice %224 {offsets = [0, 64], sizes = [8, 32], strides = [1, 1]} : vector<8x128xf32> to vector<8x32xf32>
    %228 = vector.extract_strided_slice %219 {offsets = [0, 96], sizes = [8, 32], strides = [1, 1]} : vector<8x128xf32> to vector<8x32xf32>
    %229 = math.tanh %228 : vector<8x32xf32>
    %230 = arith.mulf %226, %192 : vector<8x32xf32>
    %231 = arith.mulf %225, %229 : vector<8x32xf32>
    %232 = arith.addf %230, %231 : vector<8x32xf32>
    %233 = math.tanh %232 : vector<8x32xf32>
    %234 = arith.mulf %227, %233 : vector<8x32xf32>
    %235 = vector.extract_strided_slice %11 {offsets = [48, 0], sizes = [8, 128], strides = [1, 1]} : vector<64x128xf32> to vector<8x128xf32>
    %236 = arith.truncf %213 : vector<8x32xf32> to vector<8x32xbf16>
    %cst_41 = arith.constant dense<0.000000e+00> : vector<8x128xf32>
    %237 = tpu.matmul %236, %1, %cst_41 {dimension_numbers = #tpu.dot_dimension_numbers<[1], [0], [0], [1], [0, 0, 1, 1], [], []>} : vector<8x32xbf16>, vector<32x128xbf16>, vector<8x128xf32> -> vector<8x128xf32>
    %238 = arith.addf %235, %237 : vector<8x128xf32>
    %239 = arith.negf %238 : vector<8x128xf32>
    %240 = math.exp %239 : vector<8x128xf32>
    %cst_42 = arith.constant 1.000000e+00 : f32
    %241 = vector.broadcast %cst_42 : f32 to vector<8x128xf32>
    %242 = arith.addf %241, %240 : vector<8x128xf32>
    %243 = arith.divf %241, %242 : vector<8x128xf32>
    %244 = vector.extract_strided_slice %243 {offsets = [0, 0], sizes = [8, 32], strides = [1, 1]} : vector<8x128xf32> to vector<8x32xf32>
    %245 = vector.extract_strided_slice %243 {offsets = [0, 32], sizes = [8, 32], strides = [1, 1]} : vector<8x128xf32> to vector<8x32xf32>
    %246 = vector.extract_strided_slice %243 {offsets = [0, 64], sizes = [8, 32], strides = [1, 1]} : vector<8x128xf32> to vector<8x32xf32>
    %247 = vector.extract_strided_slice %238 {offsets = [0, 96], sizes = [8, 32], strides = [1, 1]} : vector<8x128xf32> to vector<8x32xf32>
    %248 = math.tanh %247 : vector<8x32xf32>
    %249 = arith.mulf %245, %211 : vector<8x32xf32>
    %250 = arith.mulf %244, %248 : vector<8x32xf32>
    %251 = arith.addf %249, %250 : vector<8x32xf32>
    %252 = math.tanh %251 : vector<8x32xf32>
    %253 = arith.mulf %246, %252 : vector<8x32xf32>
    %254 = arith.truncf %213 : vector<8x32xf32> to vector<8x32xbf16>
    %255 = arith.truncf %234 : vector<8x32xf32> to vector<8x32xbf16>
    %256 = tpu.concatenate %254, %255 in 1 : vector<8x32xbf16>, vector<8x32xbf16> -> vector<8x64xbf16>
    %cst_43 = arith.constant dense<0.000000e+00> : vector<8x128xf32>
    %257 = tpu.matmul %256, %3, %cst_43 {dimension_numbers = #tpu.dot_dimension_numbers<[1], [0], [0], [1], [0, 0, 1, 1], [], []>} : vector<8x64xbf16>, vector<64x128xbf16>, vector<8x128xf32> -> vector<8x128xf32>
    %258 = vector.broadcast %4 : vector<1x128xf32> to vector<8x128xf32>
    %259 = arith.addf %257, %258 : vector<8x128xf32>
    %260 = arith.negf %259 : vector<8x128xf32>
    %261 = math.exp %260 : vector<8x128xf32>
    %cst_44 = arith.constant 1.000000e+00 : f32
    %262 = vector.broadcast %cst_44 : f32 to vector<8x128xf32>
    %263 = arith.addf %262, %261 : vector<8x128xf32>
    %264 = arith.divf %262, %263 : vector<8x128xf32>
    %265 = vector.extract_strided_slice %264 {offsets = [0, 0], sizes = [8, 32], strides = [1, 1]} : vector<8x128xf32> to vector<8x32xf32>
    %266 = vector.extract_strided_slice %264 {offsets = [0, 32], sizes = [8, 32], strides = [1, 1]} : vector<8x128xf32> to vector<8x32xf32>
    %267 = vector.extract_strided_slice %264 {offsets = [0, 64], sizes = [8, 32], strides = [1, 1]} : vector<8x128xf32> to vector<8x32xf32>
    %268 = vector.extract_strided_slice %259 {offsets = [0, 96], sizes = [8, 32], strides = [1, 1]} : vector<8x128xf32> to vector<8x32xf32>
    %269 = math.tanh %268 : vector<8x32xf32>
    %270 = arith.mulf %266, %232 : vector<8x32xf32>
    %271 = arith.mulf %265, %269 : vector<8x32xf32>
    %272 = arith.addf %270, %271 : vector<8x32xf32>
    %273 = math.tanh %272 : vector<8x32xf32>
    %274 = arith.mulf %267, %273 : vector<8x32xf32>
    %275 = vector.extract_strided_slice %11 {offsets = [56, 0], sizes = [8, 128], strides = [1, 1]} : vector<64x128xf32> to vector<8x128xf32>
    %276 = arith.truncf %253 : vector<8x32xf32> to vector<8x32xbf16>
    %cst_45 = arith.constant dense<0.000000e+00> : vector<8x128xf32>
    %277 = tpu.matmul %276, %1, %cst_45 {dimension_numbers = #tpu.dot_dimension_numbers<[1], [0], [0], [1], [0, 0, 1, 1], [], []>} : vector<8x32xbf16>, vector<32x128xbf16>, vector<8x128xf32> -> vector<8x128xf32>
    %278 = arith.addf %275, %277 : vector<8x128xf32>
    %279 = arith.negf %278 : vector<8x128xf32>
    %280 = math.exp %279 : vector<8x128xf32>
    %cst_46 = arith.constant 1.000000e+00 : f32
    %281 = vector.broadcast %cst_46 : f32 to vector<8x128xf32>
    %282 = arith.addf %281, %280 : vector<8x128xf32>
    %283 = arith.divf %281, %282 : vector<8x128xf32>
    %284 = vector.extract_strided_slice %283 {offsets = [0, 0], sizes = [8, 32], strides = [1, 1]} : vector<8x128xf32> to vector<8x32xf32>
    %285 = vector.extract_strided_slice %283 {offsets = [0, 32], sizes = [8, 32], strides = [1, 1]} : vector<8x128xf32> to vector<8x32xf32>
    %286 = vector.extract_strided_slice %283 {offsets = [0, 64], sizes = [8, 32], strides = [1, 1]} : vector<8x128xf32> to vector<8x32xf32>
    %287 = vector.extract_strided_slice %278 {offsets = [0, 96], sizes = [8, 32], strides = [1, 1]} : vector<8x128xf32> to vector<8x32xf32>
    %288 = math.tanh %287 : vector<8x32xf32>
    %289 = arith.mulf %285, %251 : vector<8x32xf32>
    %290 = arith.mulf %284, %288 : vector<8x32xf32>
    %291 = arith.addf %289, %290 : vector<8x32xf32>
    %292 = math.tanh %291 : vector<8x32xf32>
    %293 = arith.mulf %286, %292 : vector<8x32xf32>
    %294 = arith.truncf %253 : vector<8x32xf32> to vector<8x32xbf16>
    %295 = arith.truncf %274 : vector<8x32xf32> to vector<8x32xbf16>
    %296 = tpu.concatenate %294, %295 in 1 : vector<8x32xbf16>, vector<8x32xbf16> -> vector<8x64xbf16>
    %cst_47 = arith.constant dense<0.000000e+00> : vector<8x128xf32>
    %297 = tpu.matmul %296, %3, %cst_47 {dimension_numbers = #tpu.dot_dimension_numbers<[1], [0], [0], [1], [0, 0, 1, 1], [], []>} : vector<8x64xbf16>, vector<64x128xbf16>, vector<8x128xf32> -> vector<8x128xf32>
    %298 = vector.broadcast %4 : vector<1x128xf32> to vector<8x128xf32>
    %299 = arith.addf %297, %298 : vector<8x128xf32>
    %300 = arith.negf %299 : vector<8x128xf32>
    %301 = math.exp %300 : vector<8x128xf32>
    %cst_48 = arith.constant 1.000000e+00 : f32
    %302 = vector.broadcast %cst_48 : f32 to vector<8x128xf32>
    %303 = arith.addf %302, %301 : vector<8x128xf32>
    %304 = arith.divf %302, %303 : vector<8x128xf32>
    %305 = vector.extract_strided_slice %304 {offsets = [0, 0], sizes = [8, 32], strides = [1, 1]} : vector<8x128xf32> to vector<8x32xf32>
    %306 = vector.extract_strided_slice %304 {offsets = [0, 32], sizes = [8, 32], strides = [1, 1]} : vector<8x128xf32> to vector<8x32xf32>
    %307 = vector.extract_strided_slice %304 {offsets = [0, 64], sizes = [8, 32], strides = [1, 1]} : vector<8x128xf32> to vector<8x32xf32>
    %308 = vector.extract_strided_slice %299 {offsets = [0, 96], sizes = [8, 32], strides = [1, 1]} : vector<8x128xf32> to vector<8x32xf32>
    %309 = math.tanh %308 : vector<8x32xf32>
    %310 = arith.mulf %306, %272 : vector<8x32xf32>
    %311 = arith.mulf %305, %309 : vector<8x32xf32>
    %312 = arith.addf %310, %311 : vector<8x32xf32>
    %313 = math.tanh %312 : vector<8x32xf32>
    %314 = arith.mulf %307, %313 : vector<8x32xf32>
    %315 = arith.truncf %293 : vector<8x32xf32> to vector<8x32xbf16>
    %316 = arith.truncf %314 : vector<8x32xf32> to vector<8x32xbf16>
    %317 = tpu.concatenate %315, %316 in 1 : vector<8x32xbf16>, vector<8x32xbf16> -> vector<8x64xbf16>
    %cst_49 = arith.constant dense<0.000000e+00> : vector<8x128xf32>
    %318 = tpu.matmul %317, %3, %cst_49 {dimension_numbers = #tpu.dot_dimension_numbers<[1], [0], [0], [1], [0, 0, 1, 1], [], []>} : vector<8x64xbf16>, vector<64x128xbf16>, vector<8x128xf32> -> vector<8x128xf32>
    %319 = vector.broadcast %4 : vector<1x128xf32> to vector<8x128xf32>
    %320 = arith.addf %318, %319 : vector<8x128xf32>
    %321 = arith.negf %320 : vector<8x128xf32>
    %322 = math.exp %321 : vector<8x128xf32>
    %cst_50 = arith.constant 1.000000e+00 : f32
    %323 = vector.broadcast %cst_50 : f32 to vector<8x128xf32>
    %324 = arith.addf %323, %322 : vector<8x128xf32>
    %325 = arith.divf %323, %324 : vector<8x128xf32>
    %326 = vector.extract_strided_slice %325 {offsets = [0, 0], sizes = [8, 32], strides = [1, 1]} : vector<8x128xf32> to vector<8x32xf32>
    %327 = vector.extract_strided_slice %325 {offsets = [0, 32], sizes = [8, 32], strides = [1, 1]} : vector<8x128xf32> to vector<8x32xf32>
    %328 = vector.extract_strided_slice %325 {offsets = [0, 64], sizes = [8, 32], strides = [1, 1]} : vector<8x128xf32> to vector<8x32xf32>
    %329 = vector.extract_strided_slice %320 {offsets = [0, 96], sizes = [8, 32], strides = [1, 1]} : vector<8x128xf32> to vector<8x32xf32>
    %330 = math.tanh %329 : vector<8x32xf32>
    %331 = arith.mulf %327, %312 : vector<8x32xf32>
    %332 = arith.mulf %326, %330 : vector<8x32xf32>
    %333 = arith.addf %331, %332 : vector<8x32xf32>
    %334 = math.tanh %333 : vector<8x32xf32>
    %335 = arith.mulf %328, %334 : vector<8x32xf32>
    %336 = arith.truncf %335 : vector<8x32xf32> to vector<8x32xbf16>
    %cst_51 = arith.constant dense<0.000000e+00> : vector<8x128xf32>
    %337 = tpu.matmul %336, %5, %cst_51 {dimension_numbers = #tpu.dot_dimension_numbers<[1], [0], [0], [1], [0, 0, 1, 1], [], []>} : vector<8x32xbf16>, vector<32x128xbf16>, vector<8x128xf32> -> vector<8x128xf32>
    %338 = vector.broadcast %6 : vector<1x128xf32> to vector<8x128xf32>
    %339 = arith.addf %337, %338 : vector<8x128xf32>
    %c0_52 = arith.constant 0 : index
    %c0_53 = arith.constant 0 : index
    %340 = vector.load %arg8[%c0_52, %c0_53] : memref<8x128xf32, #tpu.memory_space<vmem>>, vector<8x128xf32>
    tpu.vector_store %arg8[%c0_52, %c0_53], %339 {strides = array<i32>} : memref<8x128xf32, #tpu.memory_space<vmem>>, vector<8x128xf32>,
    return
  }
}

</mosaic_0001>

<llo_original>
// kernel: tpu_custom_call.1
$region0: #{tpu_custom_call.1}
  #allocation0 [shape = 'u32[]', space=smem, size = 0x4, offset = 0x4, fixed_abs, tag = 'smem constant byte address 0x4 - core index']
  #allocation1 [shape = 'u32[144,128]{1,0:T(1,128)}', space=vmem, size = 0x12000, scoped, tag = 'internal scratch']
  %s0 = inlined_call_operand.vmem [shape: f32[64,4], index: 0, kind: input, shape index: {}]
  %s1 = inlined_call_operand.vmem [shape: bf16[4,128], index: 1, kind: input, shape index: {}]
  %s2 = inlined_call_operand.vmem [shape: bf16[32,128], index: 2, kind: input, shape index: {}]
  %s3 = inlined_call_operand.vmem [shape: f32[1,128], index: 3, kind: input, shape index: {}]
  %s4 = inlined_call_operand.vmem [shape: bf16[64,128], index: 4, kind: input, shape index: {}]
  %s5 = inlined_call_operand.vmem [shape: f32[1,128], index: 5, kind: input, shape index: {}]
  %s6 = inlined_call_operand.vmem [shape: bf16[32,128], index: 6, kind: input, shape index: {}]
  %s7 = inlined_call_operand.vmem [shape: f32[1,128], index: 7, kind: input, shape index: {}]
  %s8 = inlined_call_operand.hbm [shape: f32[8,128], index: 8, kind: output, shape index: {}]
  %s9 = sld [smem:[#allocation0]]
  $region42: #{tpu_custom_call.1} parent=0
    _
  %s11 = ssub.s32 1, %s9
  %s12 = scalar_select 0, %s11, %s9
  $region1: #{tpu_custom_call.1} parent=0
    #allocation2 [shape = 'u8[4096]{0}', space=vmem, size = 0x1000, scoped, tag = 'output window, operand 0, single buffered']
    #allocation3 [shape = 's32[1]{0}', space=sflag, size = 0x4, scoped, tag = 'scoped memory for tpu_custom_call.1']
    %13 = vsyncpa [#allocation3], 0
    // Predicated region
    $region2: #{tpu_custom_call.1} parent=1 // pred_check
      _
    $region3: #{tpu_custom_call.1} parent=1 // pred_check_branch
      %15 = sbr.rel (0) target = $region5
    $region4: #{tpu_custom_call.1} parent=1 // pred_region
      _
    $region5: #{tpu_custom_call.1} parent=1 // pred_fallthru
      _
    // Predicated region
    $region6: #{tpu_custom_call.1} parent=1 // pred_check
      _
    $region7: #{tpu_custom_call.1} parent=1 // pred_check_branch
      %17 = sbr.rel (0) target = $region9
    $region8: #{tpu_custom_call.1} parent=1 // pred_region
      _
    $region9: #{tpu_custom_call.1} parent=1 // pred_fallthru
      _
    // Predicated region
    $region10: #{tpu_custom_call.1} parent=1 // pred_check
      _
    $region11: #{tpu_custom_call.1} parent=1 // pred_check_branch
      %19 = sbr.rel (0) target = $region13
    $region12: #{tpu_custom_call.1} parent=1 // pred_region
      _
    $region13: #{tpu_custom_call.1} parent=1 // pred_fallthru
      _
    // Predicated region
    $region14: #{tpu_custom_call.1} parent=1 // pred_check
      _
    $region15: #{tpu_custom_call.1} parent=1 // pred_check_branch
      %21 = sbr.rel (0) target = $region17
    $region16: #{tpu_custom_call.1} parent=1 // pred_region
      _
    $region17: #{tpu_custom_call.1} parent=1 // pred_fallthru
      _
    // Predicated region
    $region18: #{tpu_custom_call.1} parent=1 // pred_check
      _
    $region19: #{tpu_custom_call.1} parent=1 // pred_check_branch
      %23 = sbr.rel (0) target = $region21
    $region20: #{tpu_custom_call.1} parent=1 // pred_region
      _
    $region21: #{tpu_custom_call.1} parent=1 // pred_fallthru
      _
    // Predicated region
    $region22: #{tpu_custom_call.1} parent=1 // pred_check
      _
    $region23: #{tpu_custom_call.1} parent=1 // pred_check_branch
      %25 = sbr.rel (0) target = $region25
    $region24: #{tpu_custom_call.1} parent=1 // pred_region
      _
    $region25: #{tpu_custom_call.1} parent=1 // pred_fallthru
      _
    // Predicated region
    $region26: #{tpu_custom_call.1} parent=1 // pred_check
      _
    $region27: #{tpu_custom_call.1} parent=1 // pred_check_branch
      %27 = sbr.rel (0) target = $region29
    $region28: #{tpu_custom_call.1} parent=1 // pred_region
      _
    $region29: #{tpu_custom_call.1} parent=1 // pred_fallthru
      _
    // Predicated region
    $region30: #{tpu_custom_call.1} parent=1 // pred_check
      _
    $region31: #{tpu_custom_call.1} parent=1 // pred_check_branch
      %29 = sbr.rel (0) target = $region33
    $region32: #{tpu_custom_call.1} parent=1 // pred_region
      _
    $region33: #{tpu_custom_call.1} parent=1 // pred_fallthru
      _
    %v31 = vld [vmem:[%s1] sm:$0x3]
    %v32 = vld [vmem:[%s2] sm:$0xf]
    %v33 = vld [vmem:[%s2 + $0x4] sm:$0xf]
    %v34 = vld [vmem:[%s2 + $0x8] sm:$0xf]
    %v35 = vld [vmem:[%s2 + $0xc] sm:$0xf]
    %v36 = vld [vmem:[%s3] sm:$0x1]
    %v37 = vld [vmem:[%s4] sm:$0xf]
    %v38 = vld [vmem:[%s4 + $0x4] sm:$0xf]
    %v39 = vld [vmem:[%s4 + $0x8] sm:$0xf]
    %v40 = vld [vmem:[%s4 + $0xc] sm:$0xf]
    %v41 = vld [vmem:[%s4 + $0x10] sm:$0xf]
    %v42 = vld [vmem:[%s4 + $0x14] sm:$0xf]
    %v43 = vld [vmem:[%s4 + $0x18] sm:$0xf]
    %v44 = vld [vmem:[%s4 + $0x1c] sm:$0xf]
    %v45 = vld [vmem:[%s5] sm:$0x1]
    %v46 = vld [vmem:[%s6] sm:$0xf]
    %v47 = vld [vmem:[%s6 + $0x4] sm:$0xf]
    %v48 = vld [vmem:[%s6 + $0x8] sm:$0xf]
    %v49 = vld [vmem:[%s6 + $0xc] sm:$0xf]
    %v50 = vld [vmem:[%s7] sm:$0x1]
    %v51 = vld [vmem:[%s0] sm:$0xff]
    %v52 = vld [vmem:[%s0 + $0x8] sm:$0xff]
    %v53 = vld [vmem:[%s0 + $0x10] sm:$0xff]
    %v54 = vld [vmem:[%s0 + $0x18] sm:$0xff]
    %v55 = vld [vmem:[%s0 + $0x20] sm:$0xff]
    %v56 = vld [vmem:[%s0 + $0x28] sm:$0xff]
    %v57 = vld [vmem:[%s0 + $0x30] sm:$0xff]
    %v58 = vld [vmem:[%s0 + $0x38] sm:$0xff]
    %v59 = vpack.c.bf16 %v52, %v51
    %v60 = vpack.c.bf16 %v54, %v53
    %v61 = vpack.c.bf16 %v56, %v55
    %v62 = vpack.c.bf16 %v58, %v57
    %v64 = vlaneseq
    %v65 = vshrl.u32 %v64, 7
    %v66 = vsub.s32 0, %v65
    %v67 = vrot.slane %v36, %v66
    %vm69 = vcmask 31744
    %v71 = vsel %vm69, %v59, 0
    %v74 = vsel %vm69, %v60, 0
    %v77 = vsel %vm69, %v61, 0
    %v80 = vsel %vm69, %v62, 0
    %vm82 = vcmask 1041408
    %v84 = vsel %vm82, %v31, 0
    %86 = vmatprep.subr.bf16.mxu0 0
    %87 = vmatpush1.bf16.msra.mxu0 0
    %88 = vmatprep.subr.bf16.mxu0 0
    %89 = vmatpush1.bf16.msra.mxu0 0
    %90 = vmatprep.subr.bf16.mxu0 0
    %91 = vmatpush1.bf16.msra.mxu0 0
    %92 = vmatprep.subr.bf16.mxu0 0
    %93 = vmatpush1.bf16.msra.mxu0 0
    %94 = vmatprep.subr.bf16.mxu0 0
    %95 = vmatpush1.bf16.msra.mxu0 0
    %96 = vmatprep.subr.bf16.mxu0 0
    %97 = vmatpush1.bf16.msra.mxu0 0
    %98 = vmatprep.subr.bf16.mxu0 0
    %99 = vmatpush1.bf16.msra.mxu0 0
    %100 = vmatprep.subr.bf16.mxu0 0
    %101 = vmatpush1.bf16.msra.mxu0 %v84
    %102 = vmatprep.subr.bf16.mxu0 0
    %103 = vmatpush2.bf16.msra.mxu0 0
    %104 = vmatprep.subr.bf16.mxu0 0
    %105 = vmatpush2.bf16.msra.mxu0 0
    %106 = vmatprep.subr.bf16.mxu0 0
    %107 = vmatpush2.bf16.msra.mxu0 0
    %108 = vmatprep.subr.bf16.mxu0 0
    %109 = vmatpush2.bf16.msra.mxu0 0
    %110 = vmatprep.subr.bf16.mxu0 0
    %111 = vmatpush2.bf16.msra.mxu0 0
    %112 = vmatprep.subr.bf16.mxu0 0
    %113 = vmatpush2.bf16.msra.mxu0 0
    %114 = vmatprep.subr.bf16.mxu0 0
    %115 = vmatpush2.bf16.msra.mxu0 0
    %116 = vmatprep.subr.bf16.mxu0 0
    %117 = vmatpush2.bf16.msra.mxu0 0
    %118 = vmatprep.mubr.bf16.mxu0 0
    %119 = vmatmul.mubr.bf16.gmra.mxu0 %v71
    %v120 = vpop.f32.mrf.mxu0
    %v121 = vadd.f32 %v67, %v120
    %v122 = vpop.f32.mrf.mxu0
    %v123 = vpop.f32.mrf.mxu0
    %v124 = vadd.f32 %v67, %v123
    %v125 = vpop.f32.mrf.mxu0
    %126 = vmatprep.mubr.bf16.mxu0 0
    %127 = vmatmul.mubr.bf16.gmra.mxu0 %v74
    %v128 = vpop.f32.mrf.mxu0
    %v129 = vadd.f32 %v67, %v128
    %v130 = vpop.f32.mrf.mxu0
    %v131 = vpop.f32.mrf.mxu0
    %v132 = vadd.f32 %v67, %v131
    %v133 = vpop.f32.mrf.mxu0
    %134 = vmatprep.mubr.bf16.mxu0 0
    %135 = vmatmul.mubr.bf16.gmra.mxu0 %v77
    %v136 = vpop.f32.mrf.mxu0
    %v137 = vadd.f32 %v67, %v136
    %v138 = vpop.f32.mrf.mxu0
    %v139 = vpop.f32.mrf.mxu0
    %v140 = vadd.f32 %v67, %v139
    %v141 = vpop.f32.mrf.mxu0
    %142 = vmatprep.mubr.bf16.mxu0 0
    %143 = vmatmul.mubr.bf16.gmra.mxu0 %v80
    %v144 = vpop.f32.mrf.mxu0
    %v145 = vadd.f32 %v67, %v144
    %v146 = vpop.f32.mrf.mxu0
    %v147 = vpop.f32.mrf.mxu0
    %v148 = vadd.f32 %v67, %v147
    %v149 = vpop.f32.mrf.mxu0
    %150 = vdwg.mxu0
    %v155 = vunpack.c.l.b16 %v32
    %v156 = vunpack.c.l.b16 %v33
    %v157 = vunpack.c.l.b16 %v34
    %v158 = vunpack.c.l.b16 %v35
    %v159 = vpack.c.b16 %v156, %v155
    %v160 = vpack.c.b16 %v158, %v157
    %vm163 = vcmask 261120
    %v165 = vsel %vm163, 0, 0
    %167 = vmatprep.subr.bf16.mxu0 0
    %168 = vmatpush1.bf16.msra.mxu0 0
    %169 = vmatprep.subr.bf16.mxu0 0
    %170 = vmatpush1.bf16.msra.mxu0 0
    %171 = vmatprep.subr.bf16.mxu0 0
    %172 = vmatpush1.bf16.msra.mxu0 0
    %173 = vmatprep.subr.bf16.mxu0 0
    %174 = vmatpush1.bf16.msra.mxu0 0
    %175 = vmatprep.subr.bf16.mxu0 0
    %176 = vmatpush1.bf16.msra.mxu0 0
    %177 = vmatprep.subr.bf16.mxu0 0
    %178 = vmatpush1.bf16.msra.mxu0 0
    %179 = vmatprep.subr.bf16.mxu0 0
    %180 = vmatpush1.bf16.msra.mxu0 %v160
    %181 = vmatprep.subr.bf16.mxu0 0
    %182 = vmatpush1.bf16.msra.mxu0 %v159
    %183 = vmatprep.subr.bf16.mxu0 0
    %184 = vmatpush2.bf16.msra.mxu0 0
    %185 = vmatprep.subr.bf16.mxu0 0
    %186 = vmatpush2.bf16.msra.mxu0 0
    %187 = vmatprep.subr.bf16.mxu0 0
    %188 = vmatpush2.bf16.msra.mxu0 0
    %189 = vmatprep.subr.bf16.mxu0 0
    %190 = vmatpush2.bf16.msra.mxu0 0
    %191 = vmatprep.subr.bf16.mxu0 0
    %192 = vmatpush2.bf16.msra.mxu0 0
    %193 = vmatprep.subr.bf16.mxu0 0
    %194 = vmatpush2.bf16.msra.mxu0 0
    %195 = vmatprep.subr.bf16.mxu0 0
    %196 = vmatpush2.bf16.msra.mxu0 0
    %197 = vmatprep.subr.bf16.mxu0 0
    %198 = vmatpush2.bf16.msra.mxu0 0
    %199 = vmatprep.mubr.bf16.mxu0 0
    %200 = vmatmul.mubr.bf16.gmra.mxu0 %v165
    %v201 = vpop.f32.mrf.mxu0
    %v202 = vadd.f32 0.0, %v201
    %v203 = vpop.f32.mrf.mxu0
    %v204 = vpop.f32.mrf.mxu0
    %v205 = vpop.f32.mrf.mxu0
    %206 = vdwg.mxu0
    %v207 = vadd.f32 %v121, %v202
    %v208 = vxor.u32 %v207, 2147483648
    %v209 = vmul.f32 %v208, 1.442695
    %v210 = vpow.pop %v209
    %v211 = vadd.f32 %v210, 1.0
    %v212 = vrcp.pop %v211
    %v213 = vmul.f32 1.0, %v212
    %v214 = vtanh.pop %v207
    %v215 = vmul.f32 %v213, 0.0
    %217 = vrot.lane.b32.xlu0 %v214, 32
    %v218 = vpop.permute.xlu0 %217
    %v220 = vmul.f32 %v213, %v218
    %222 = vrot.lane.b32.xlu0 %v220, 32
    %v223 = vpop.permute.xlu0 %222
    %v225 = vadd.f32 %v215, %v223
    %v226 = vtanh.pop %v225
    %228 = vrot.lane.b32.xlu0 %v226, 32
    %v229 = vpop.permute.xlu0 %228
    %v231 = vmul.f32 %v213, %v229
    %v232 = vpack.c.bf16 %v231, %v231
    %234 = vrot.lane.b32.xlu0 %v232, 64
    %v235 = vpop.permute.xlu0 %234
    %v237 = vsel %vm163, %v235, 0
    %239 = vmatprep.subr.bf16.mxu0 0
    %240 = vmatpush1.bf16.msra.mxu0 0
    %241 = vmatprep.subr.bf16.mxu0 0
    %242 = vmatpush1.bf16.msra.mxu0 0
    %243 = vmatprep.subr.bf16.mxu0 0
    %244 = vmatpush1.bf16.msra.mxu0 0
    %245 = vmatprep.subr.bf16.mxu0 0
    %246 = vmatpush1.bf16.msra.mxu0 0
    %247 = vmatprep.subr.bf16.mxu0 0
    %248 = vmatpush1.bf16.msra.mxu0 0
    %249 = vmatprep.subr.bf16.mxu0 0
    %250 = vmatpush1.bf16.msra.mxu0 0
    %251 = vmatprep.subr.bf16.mxu0 0
    %252 = vmatpush1.bf16.msra.mxu0 %v160
    %253 = vmatprep.subr.bf16.mxu0 0
    %254 = vmatpush1.bf16.msra.mxu0 %v159
    %255 = vmatprep.subr.bf16.mxu0 0
    %256 = vmatpush2.bf16.msra.mxu0 0
    %257 = vmatprep.subr.bf16.mxu0 0
    %258 = vmatpush2.bf16.msra.mxu0 0
    %259 = vmatprep.subr.bf16.mxu0 0
    %260 = vmatpush2.bf16.msra.mxu0 0
    %261 = vmatprep.subr.bf16.mxu0 0
    %262 = vmatpush2.bf16.msra.mxu0 0
    %263 = vmatprep.subr.bf16.mxu0 0
    %264 = vmatpush2.bf16.msra.mxu0 0
    %265 = vmatprep.subr.bf16.mxu0 0
    %266 = vmatpush2.bf16.msra.mxu0 0
    %267 = vmatprep.subr.bf16.mxu0 0
    %268 = vmatpush2.bf16.msra.mxu0 0
    %269 = vmatprep.subr.bf16.mxu0 0
    %270 = vmatpush2.bf16.msra.mxu0 0
    %271 = vmatprep.mubr.bf16.mxu0 0
    %272 = vmatmul.mubr.bf16.gmra.mxu0 %v237
    %v273 = vpop.f32.mrf.mxu0
    %v274 = vadd.f32 0.0, %v273
    %v275 = vpop.f32.mrf.mxu0
    %v276 = vpop.f32.mrf.mxu0
    %v277 = vpop.f32.mrf.mxu0
    %278 = vdwg.mxu0
    %v279 = vadd.f32 %v124, %v274
    %v280 = vxor.u32 %v279, 2147483648
    %v281 = vmul.f32 %v280, 1.442695
    %v282 = vpow.pop %v281
    %v283 = vadd.f32 %v282, 1.0
    %v284 = vrcp.pop %v283
    %v285 = vmul.f32 1.0, %v284
    %v286 = vtanh.pop %v279
    %v287 = vmul.f32 %v285, %v225
    %289 = vrot.lane.b32.xlu0 %v286, 32
    %v290 = vpop.permute.xlu0 %289
    %v292 = vmul.f32 %v285, %v290
    %294 = vrot.lane.b32.xlu0 %v292, 32
    %v295 = vpop.permute.xlu0 %294
    %v297 = vadd.f32 %v287, %v295
    %v298 = vtanh.pop %v297
    %300 = vrot.lane.b32.xlu0 %v298, 32
    %v301 = vpop.permute.xlu0 %300
    %v303 = vmul.f32 %v285, %v301
    %v304 = vsel %vm163, %v235, 0
    %v306 = vlaneseq
    %v307 = vshrl.u32 %v306, 7
    %v308 = vsub.s32 0, %v307
    %v309 = vrot.slane %v45, %v308
    %v319 = vunpack.c.l.b16 %v37
    %v320 = vunpack.c.l.b16 %v38
    %v321 = vunpack.c.l.b16 %v39
    %v322 = vunpack.c.l.b16 %v40
    %v323 = vunpack.c.l.b16 %v41
    %v324 = vunpack.c.l.b16 %v42
    %v325 = vunpack.c.l.b16 %v43
    %v326 = vunpack.c.l.b16 %v44
    %v327 = vpack.c.b16 %v320, %v319
    %v328 = vpack.c.b16 %v322, %v321
    %v329 = vpack.c.b16 %v324, %v323
    %v330 = vpack.c.b16 %v326, %v325
    %vm335 = vcmask 523264
    %v336 = vsel %vm335, %v304, 0
    %338 = vmatprep.subr.bf16.mxu0 0
    %339 = vmatpush1.bf16.msra.mxu0 0
    %340 = vmatprep.subr.bf16.mxu0 0
    %341 = vmatpush1.bf16.msra.mxu0 0
    %342 = vmatprep.subr.bf16.mxu0 0
    %343 = vmatpush1.bf16.msra.mxu0 0
    %344 = vmatprep.subr.bf16.mxu0 0
    %345 = vmatpush1.bf16.msra.mxu0 0
    %346 = vmatprep.subr.bf16.mxu0 0
    %347 = vmatpush1.bf16.msra.mxu0 %v330
    %348 = vmatprep.subr.bf16.mxu0 0
    %349 = vmatpush1.bf16.msra.mxu0 %v329
    %350 = vmatprep.subr.bf16.mxu0 0
    %351 = vmatpush1.bf16.msra.mxu0 %v328
    %352 = vmatprep.subr.bf16.mxu0 0
    %353 = vmatpush1.bf16.msra.mxu0 %v327
    %354 = vmatprep.subr.bf16.mxu0 0
    %355 = vmatpush2.bf16.msra.mxu0 0
    %356 = vmatprep.subr.bf16.mxu0 0
    %357 = vmatpush2.bf16.msra.mxu0 0
    %358 = vmatprep.subr.bf16.mxu0 0
    %359 = vmatpush2.bf16.msra.mxu0 0
    %360 = vmatprep.subr.bf16.mxu0 0
    %361 = vmatpush2.bf16.msra.mxu0 0
    %362 = vmatprep.subr.bf16.mxu0 0
    %363 = vmatpush2.bf16.msra.mxu0 0
    %364 = vmatprep.subr.bf16.mxu0 0
    %365 = vmatpush2.bf16.msra.mxu0 0
    %366 = vmatprep.subr.bf16.mxu0 0
    %367 = vmatpush2.bf16.msra.mxu0 0
    %368 = vmatprep.subr.bf16.mxu0 0
    %369 = vmatpush2.bf16.msra.mxu0 0
    %370 = vmatprep.mubr.bf16.mxu0 0
    %371 = vmatmul.mubr.bf16.gmra.mxu0 %v336
    %v372 = vpop.f32.mrf.mxu0
    %v373 = vadd.f32 %v309, %v372
    %v374 = vpop.f32.mrf.mxu0
    %v375 = vpop.f32.mrf.mxu0
    %v376 = vpop.f32.mrf.mxu0
    %377 = vdwg.mxu0
    %v378 = vxor.u32 %v373, 2147483648
    %v379 = vmul.f32 %v378, 1.442695
    %v380 = vpow.pop %v379
    %v381 = vadd.f32 %v380, 1.0
    %v382 = vrcp.pop %v381
    %v383 = vmul.f32 1.0, %v382
    %v384 = vtanh.pop %v373
    %v385 = vmul.f32 %v383, 0.0
    %387 = vrot.lane.b32.xlu0 %v384, 32
    %v388 = vpop.permute.xlu0 %387
    %v390 = vmul.f32 %v383, %v388
    %392 = vrot.lane.b32.xlu0 %v390, 32
    %v393 = vpop.permute.xlu0 %392
    %v395 = vadd.f32 %v385, %v393
    %v396 = vtanh.pop %v395
    %398 = vrot.lane.b32.xlu0 %v396, 32
    %v399 = vpop.permute.xlu0 %398
    %v401 = vmul.f32 %v383, %v399
    %v402 = vpack.c.bf16 %v303, %v303
    %404 = vrot.lane.b32.xlu0 %v402, 64
    %v405 = vpop.permute.xlu0 %404
    %v407 = vsel %vm163, %v405, 0
    %409 = vmatprep.subr.bf16.mxu0 0
    %410 = vmatpush1.bf16.msra.mxu0 0
    %411 = vmatprep.subr.bf16.mxu0 0
    %412 = vmatpush1.bf16.msra.mxu0 0
    %413 = vmatprep.subr.bf16.mxu0 0
    %414 = vmatpush1.bf16.msra.mxu0 0
    %415 = vmatprep.subr.bf16.mxu0 0
    %416 = vmatpush1.bf16.msra.mxu0 0
    %417 = vmatprep.subr.bf16.mxu0 0
    %418 = vmatpush1.bf16.msra.mxu0 0
    %419 = vmatprep.subr.bf16.mxu0 0
    %420 = vmatpush1.bf16.msra.mxu0 0
    %421 = vmatprep.subr.bf16.mxu0 0
    %422 = vmatpush1.bf16.msra.mxu0 %v160
    %423 = vmatprep.subr.bf16.mxu0 0
    %424 = vmatpush1.bf16.msra.mxu0 %v159
    %425 = vmatprep.subr.bf16.mxu0 0
    %426 = vmatpush2.bf16.msra.mxu0 0
    %427 = vmatprep.subr.bf16.mxu0 0
    %428 = vmatpush2.bf16.msra.mxu0 0
    %429 = vmatprep.subr.bf16.mxu0 0
    %430 = vmatpush2.bf16.msra.mxu0 0
    %431 = vmatprep.subr.bf16.mxu0 0
    %432 = vmatpush2.bf16.msra.mxu0 0
    %433 = vmatprep.subr.bf16.mxu0 0
    %434 = vmatpush2.bf16.msra.mxu0 0
    %435 = vmatprep.subr.bf16.mxu0 0
    %436 = vmatpush2.bf16.msra.mxu0 0
    %437 = vmatprep.subr.bf16.mxu0 0
    %438 = vmatpush2.bf16.msra.mxu0 0
    %439 = vmatprep.subr.bf16.mxu0 0
    %440 = vmatpush2.bf16.msra.mxu0 0
    %441 = vmatprep.mubr.bf16.mxu0 0
    %442 = vmatmul.mubr.bf16.gmra.mxu0 %v407
    %v443 = vpop.f32.mrf.mxu0
    %v444 = vadd.f32 0.0, %v443
    %v445 = vpop.f32.mrf.mxu0
    %v446 = vpop.f32.mrf.mxu0
    %v447 = vpop.f32.mrf.mxu0
    %448 = vdwg.mxu0
    %v449 = vadd.f32 %v129, %v444
    %v450 = vxor.u32 %v449, 2147483648
    %v451 = vmul.f32 %v450, 1.442695
    %v452 = vpow.pop %v451
    %v453 = vadd.f32 %v452, 1.0
    %v454 = vrcp.pop %v453
    %v455 = vmul.f32 1.0, %v454
    %v456 = vtanh.pop %v449
    %v457 = vmul.f32 %v455, %v297
    %459 = vrot.lane.b32.xlu0 %v456, 32
    %v460 = vpop.permute.xlu0 %459
    %v462 = vmul.f32 %v455, %v460
    %464 = vrot.lane.b32.xlu0 %v462, 32
    %v465 = vpop.permute.xlu0 %464
    %v467 = vadd.f32 %v457, %v465
    %v468 = vtanh.pop %v467
    %470 = vrot.lane.b32.xlu0 %v468, 32
    %v471 = vpop.permute.xlu0 %470
    %v473 = vmul.f32 %v455, %v471
    %v474 = vpack.c.bf16 %v401, %v401
    %476 = vrot.lane.b32.xlu0 %v474, 96
    %v477 = vpop.permute.xlu0 %476
    %v479 = vsel %vm163, %v405, %v477
    %v480 = vsel %vm335, %v479, 0
    %482 = vmatprep.subr.bf16.mxu0 0
    %483 = vmatpush1.bf16.msra.mxu0 0
    %484 = vmatprep.subr.bf16.mxu0 0
    %485 = vmatpush1.bf16.msra.mxu0 0
    %486 = vmatprep.subr.bf16.mxu0 0
    %487 = vmatpush1.bf16.msra.mxu0 0
    %488 = vmatprep.subr.bf16.mxu0 0
    %489 = vmatpush1.bf16.msra.mxu0 0
    %490 = vmatprep.subr.bf16.mxu0 0
    %491 = vmatpush1.bf16.msra.mxu0 %v330
    %492 = vmatprep.subr.bf16.mxu0 0
    %493 = vmatpush1.bf16.msra.mxu0 %v329
    %494 = vmatprep.subr.bf16.mxu0 0
    %495 = vmatpush1.bf16.msra.mxu0 %v328
    %496 = vmatprep.subr.bf16.mxu0 0
    %497 = vmatpush1.bf16.msra.mxu0 %v327
    %498 = vmatprep.subr.bf16.mxu0 0
    %499 = vmatpush2.bf16.msra.mxu0 0
    %500 = vmatprep.subr.bf16.mxu0 0
    %501 = vmatpush2.bf16.msra.mxu0 0
    %502 = vmatprep.subr.bf16.mxu0 0
    %503 = vmatpush2.bf16.msra.mxu0 0
    %504 = vmatprep.subr.bf16.mxu0 0
    %505 = vmatpush2.bf16.msra.mxu0 0
    %506 = vmatprep.subr.bf16.mxu0 0
    %507 = vmatpush2.bf16.msra.mxu0 0
    %508 = vmatprep.subr.bf16.mxu0 0
    %509 = vmatpush2.bf16.msra.mxu0 0
    %510 = vmatprep.subr.bf16.mxu0 0
    %511 = vmatpush2.bf16.msra.mxu0 0
    %512 = vmatprep.subr.bf16.mxu0 0
    %513 = vmatpush2.bf16.msra.mxu0 0
    %514 = vmatprep.mubr.bf16.mxu0 0
    %515 = vmatmul.mubr.bf16.gmra.mxu0 %v480
    %v516 = vpop.f32.mrf.mxu0
    %v517 = vadd.f32 %v309, %v516
    %v518 = vpop.f32.mrf.mxu0
    %v519 = vpop.f32.mrf.mxu0
    %v520 = vpop.f32.mrf.mxu0
    %521 = vdwg.mxu0
    %v522 = vxor.u32 %v517, 2147483648
    %v523 = vmul.f32 %v522, 1.442695
    %v524 = vpow.pop %v523
    %v525 = vadd.f32 %v524, 1.0
    %v526 = vrcp.pop %v525
    %v527 = vmul.f32 1.0, %v526
    %v528 = vtanh.pop %v517
    %v529 = vmul.f32 %v527, %v395
    %531 = vrot.lane.b32.xlu0 %v528, 32
    %v532 = vpop.permute.xlu0 %531
    %v534 = vmul.f32 %v527, %v532
    %536 = vrot.lane.b32.xlu0 %v534, 32
    %v537 = vpop.permute.xlu0 %536
    %v539 = vadd.f32 %v529, %v537
    %v540 = vtanh.pop %v539
    %542 = vrot.lane.b32.xlu0 %v540, 32
    %v543 = vpop.permute.xlu0 %542
    %v545 = vmul.f32 %v527, %v543
    %v546 = vpack.c.bf16 %v473, %v473
    %548 = vrot.lane.b32.xlu0 %v546, 64
    %v549 = vpop.permute.xlu0 %548
    %v551 = vsel %vm163, %v549, 0
    %553 = vmatprep.subr.bf16.mxu0 0
    %554 = vmatpush1.bf16.msra.mxu0 0
    %555 = vmatprep.subr.bf16.mxu0 0
    %556 = vmatpush1.bf16.msra.mxu0 0
    %557 = vmatprep.subr.bf16.mxu0 0
    %558 = vmatpush1.bf16.msra.mxu0 0
    %559 = vmatprep.subr.bf16.mxu0 0
    %560 = vmatpush1.bf16.msra.mxu0 0
    %561 = vmatprep.subr.bf16.mxu0 0
    %562 = vmatpush1.bf16.msra.mxu0 0
    %563 = vmatprep.subr.bf16.mxu0 0
    %564 = vmatpush1.bf16.msra.mxu0 0
    %565 = vmatprep.subr.bf16.mxu0 0
    %566 = vmatpush1.bf16.msra.mxu0 %v160
    %567 = vmatprep.subr.bf16.mxu0 0
    %568 = vmatpush1.bf16.msra.mxu0 %v159
    %569 = vmatprep.subr.bf16.mxu0 0
    %570 = vmatpush2.bf16.msra.mxu0 0
    %571 = vmatprep.subr.bf16.mxu0 0
    %572 = vmatpush2.bf16.msra.mxu0 0
    %573 = vmatprep.subr.bf16.mxu0 0
    %574 = vmatpush2.bf16.msra.mxu0 0
    %575 = vmatprep.subr.bf16.mxu0 0
    %576 = vmatpush2.bf16.msra.mxu0 0
    %577 = vmatprep.subr.bf16.mxu0 0
    %578 = vmatpush2.bf16.msra.mxu0 0
    %579 = vmatprep.subr.bf16.mxu0 0
    %580 = vmatpush2.bf16.msra.mxu0 0
    %581 = vmatprep.subr.bf16.mxu0 0
    %582 = vmatpush2.bf16.msra.mxu0 0
    %583 = vmatprep.subr.bf16.mxu0 0
    %584 = vmatpush2.bf16.msra.mxu0 0
    %585 = vmatprep.mubr.bf16.mxu0 0
    %586 = vmatmul.mubr.bf16.gmra.mxu0 %v551
    %v587 = vpop.f32.mrf.mxu0
    %v588 = vadd.f32 0.0, %v587
    %v589 = vpop.f32.mrf.mxu0
    %v590 = vpop.f32.mrf.mxu0
    %v591 = vpop.f32.mrf.mxu0
    %592 = vdwg.mxu0
    %v593 = vadd.f32 %v132, %v588
    %v594 = vxor.u32 %v593, 2147483648
    %v595 = vmul.f32 %v594, 1.442695
    %v596 = vpow.pop %v595
    %v597 = vadd.f32 %v596, 1.0
    %v598 = vrcp.pop %v597
    %v599 = vmul.f32 1.0, %v598
    %v600 = vtanh.pop %v593
    %v601 = vmul.f32 %v599, %v467
    %603 = vrot.lane.b32.xlu0 %v600, 32
    %v604 = vpop.permute.xlu0 %603
    %v606 = vmul.f32 %v599, %v604
    %608 = vrot.lane.b32.xlu0 %v606, 32
    %v609 = vpop.permute.xlu0 %608
    %v611 = vadd.f32 %v601, %v609
    %v612 = vtanh.pop %v611
    %614 = vrot.lane.b32.xlu0 %v612, 32
    %v615 = vpop.permute.xlu0 %614
    %v617 = vmul.f32 %v599, %v615
    %v618 = vpack.c.bf16 %v545, %v545
    %620 = vrot.lane.b32.xlu0 %v618, 96
    %v621 = vpop.permute.xlu0 %620
    %v623 = vsel %vm163, %v549, %v621
    %v624 = vsel %vm335, %v623, 0
    %626 = vmatprep.subr.bf16.mxu0 0
    %627 = vmatpush1.bf16.msra.mxu0 0
    %628 = vmatprep.subr.bf16.mxu0 0
    %629 = vmatpush1.bf16.msra.mxu0 0
    %630 = vmatprep.subr.bf16.mxu0 0
    %631 = vmatpush1.bf16.msra.mxu0 0
    %632 = vmatprep.subr.bf16.mxu0 0
    %633 = vmatpush1.bf16.msra.mxu0 0
    %634 = vmatprep.subr.bf16.mxu0 0
    %635 = vmatpush1.bf16.msra.mxu0 %v330
    %636 = vmatprep.subr.bf16.mxu0 0
    %637 = vmatpush1.bf16.msra.mxu0 %v329
    %638 = vmatprep.subr.bf16.mxu0 0
    %639 = vmatpush1.bf16.msra.mxu0 %v328
    %640 = vmatprep.subr.bf16.mxu0 0
    %641 = vmatpush1.bf16.msra.mxu0 %v327
    %642 = vmatprep.subr.bf16.mxu0 0
    %643 = vmatpush2.bf16.msra.mxu0 0
    %644 = vmatprep.subr.bf16.mxu0 0
    %645 = vmatpush2.bf16.msra.mxu0 0
    %646 = vmatprep.subr.bf16.mxu0 0
    %647 = vmatpush2.bf16.msra.mxu0 0
    %648 = vmatprep.subr.bf16.mxu0 0
    %649 = vmatpush2.bf16.msra.mxu0 0
    %650 = vmatprep.subr.bf16.mxu0 0
    %651 = vmatpush2.bf16.msra.mxu0 0
    %652 = vmatprep.subr.bf16.mxu0 0
    %653 = vmatpush2.bf16.msra.mxu0 0
    %654 = vmatprep.subr.bf16.mxu0 0
    %655 = vmatpush2.bf16.msra.mxu0 0
    %656 = vmatprep.subr.bf16.mxu0 0
    %657 = vmatpush2.bf16.msra.mxu0 0
    %658 = vmatprep.mubr.bf16.mxu0 0
    %659 = vmatmul.mubr.bf16.gmra.mxu0 %v624
    %v660 = vpop.f32.mrf.mxu0
    %v661 = vadd.f32 %v309, %v660
    %v662 = vpop.f32.mrf.mxu0
    %v663 = vpop.f32.mrf.mxu0
    %v664 = vpop.f32.mrf.mxu0
    %665 = vdwg.mxu0
    %v666 = vxor.u32 %v661, 2147483648
    %v667 = vmul.f32 %v666, 1.442695
    %v668 = vpow.pop %v667
    %v669 = vadd.f32 %v668, 1.0
    %v670 = vrcp.pop %v669
    %v671 = vmul.f32 1.0, %v670
    %v672 = vtanh.pop %v661
    %v673 = vmul.f32 %v671, %v539
    %675 = vrot.lane.b32.xlu0 %v672, 32
    %v676 = vpop.permute.xlu0 %675
    %v678 = vmul.f32 %v671, %v676
    %680 = vrot.lane.b32.xlu0 %v678, 32
    %v681 = vpop.permute.xlu0 %680
    %v683 = vadd.f32 %v673, %v681
    %v684 = vtanh.pop %v683
    %686 = vrot.lane.b32.xlu0 %v684, 32
    %v687 = vpop.permute.xlu0 %686
    %v689 = vmul.f32 %v671, %v687
    %v690 = vpack.c.bf16 %v617, %v617
    %692 = vrot.lane.b32.xlu0 %v690, 64
    %v693 = vpop.permute.xlu0 %692
    %v695 = vsel %vm163, %v693, 0
    %697 = vmatprep.subr.bf16.mxu0 0
    %698 = vmatpush1.bf16.msra.mxu0 0
    %699 = vmatprep.subr.bf16.mxu0 0
    %700 = vmatpush1.bf16.msra.mxu0 0
    %701 = vmatprep.subr.bf16.mxu0 0
    %702 = vmatpush1.bf16.msra.mxu0 0
    %703 = vmatprep.subr.bf16.mxu0 0
    %704 = vmatpush1.bf16.msra.mxu0 0
    %705 = vmatprep.subr.bf16.mxu0 0
    %706 = vmatpush1.bf16.msra.mxu0 0
    %707 = vmatprep.subr.bf16.mxu0 0
    %708 = vmatpush1.bf16.msra.mxu0 0
    %709 = vmatprep.subr.bf16.mxu0 0
    %710 = vmatpush1.bf16.msra.mxu0 %v160
    %711 = vmatprep.subr.bf16.mxu0 0
    %712 = vmatpush1.bf16.msra.mxu0 %v159
    %713 = vmatprep.subr.bf16.mxu0 0
    %714 = vmatpush2.bf16.msra.mxu0 0
    %715 = vmatprep.subr.bf16.mxu0 0
    %716 = vmatpush2.bf16.msra.mxu0 0
    %717 = vmatprep.subr.bf16.mxu0 0
    %718 = vmatpush2.bf16.msra.mxu0 0
    %719 = vmatprep.subr.bf16.mxu0 0
    %720 = vmatpush2.bf16.msra.mxu0 0
    %721 = vmatprep.subr.bf16.mxu0 0
    %722 = vmatpush2.bf16.msra.mxu0 0
    %723 = vmatprep.subr.bf16.mxu0 0
    %724 = vmatpush2.bf16.msra.mxu0 0
    %725 = vmatprep.subr.bf16.mxu0 0
    %726 = vmatpush2.bf16.msra.mxu0 0
    %727 = vmatprep.subr.bf16.mxu0 0
    %728 = vmatpush2.bf16.msra.mxu0 0
    %729 = vmatprep.mubr.bf16.mxu0 0
    %730 = vmatmul.mubr.bf16.gmra.mxu0 %v695
    %v731 = vpop.f32.mrf.mxu0
    %v732 = vadd.f32 0.0, %v731
    %v733 = vpop.f32.mrf.mxu0
    %v734 = vpop.f32.mrf.mxu0
    %v735 = vpop.f32.mrf.mxu0
    %736 = vdwg.mxu0
    %v737 = vadd.f32 %v137, %v732
    %v738 = vxor.u32 %v737, 2147483648
    %v739 = vmul.f32 %v738, 1.442695
    %v740 = vpow.pop %v739
    %v741 = vadd.f32 %v740, 1.0
    %v742 = vrcp.pop %v741
    %v743 = vmul.f32 1.0, %v742
    %v744 = vtanh.pop %v737
    %v745 = vmul.f32 %v743, %v611
    %747 = vrot.lane.b32.xlu0 %v744, 32
    %v748 = vpop.permute.xlu0 %747
    %v750 = vmul.f32 %v743, %v748
    %752 = vrot.lane.b32.xlu0 %v750, 32
    %v753 = vpop.permute.xlu0 %752
    %v755 = vadd.f32 %v745, %v753
    %v756 = vtanh.pop %v755
    %758 = vrot.lane.b32.xlu0 %v756, 32
    %v759 = vpop.permute.xlu0 %758
    %v761 = vmul.f32 %v743, %v759
    %v762 = vpack.c.bf16 %v689, %v689
    %764 = vrot.lane.b32.xlu0 %v762, 96
    %v765 = vpop.permute.xlu0 %764
    %v767 = vsel %vm163, %v693, %v765
    %v768 = vsel %vm335, %v767, 0
    %770 = vmatprep.subr.bf16.mxu0 0
    %771 = vmatpush1.bf16.msra.mxu0 0
    %772 = vmatprep.subr.bf16.mxu0 0
    %773 = vmatpush1.bf16.msra.mxu0 0
    %774 = vmatprep.subr.bf16.mxu0 0
    %775 = vmatpush1.bf16.msra.mxu0 0
    %776 = vmatprep.subr.bf16.mxu0 0
    %777 = vmatpush1.bf16.msra.mxu0 0
    %778 = vmatprep.subr.bf16.mxu0 0
    %779 = vmatpush1.bf16.msra.mxu0 %v330
    %780 = vmatprep.subr.bf16.mxu0 0
    %781 = vmatpush1.bf16.msra.mxu0 %v329
    %782 = vmatprep.subr.bf16.mxu0 0
    %783 = vmatpush1.bf16.msra.mxu0 %v328
    %784 = vmatprep.subr.bf16.mxu0 0
    %785 = vmatpush1.bf16.msra.mxu0 %v327
    %786 = vmatprep.subr.bf16.mxu0 0
    %787 = vmatpush2.bf16.msra.mxu0 0
    %788 = vmatprep.subr.bf16.mxu0 0
    %789 = vmatpush2.bf16.msra.mxu0 0
    %790 = vmatprep.subr.bf16.mxu0 0
    %791 = vmatpush2.bf16.msra.mxu0 0
    %792 = vmatprep.subr.bf16.mxu0 0
    %793 = vmatpush2.bf16.msra.mxu0 0
    %794 = vmatprep.subr.bf16.mxu0 0
    %795 = vmatpush2.bf16.msra.mxu0 0
    %796 = vmatprep.subr.bf16.mxu0 0
    %797 = vmatpush2.bf16.msra.mxu0 0
    %798 = vmatprep.subr.bf16.mxu0 0
    %799 = vmatpush2.bf16.msra.mxu0 0
    %800 = vmatprep.subr.bf16.mxu0 0
    %801 = vmatpush2.bf16.msra.mxu0 0
    %802 = vmatprep.mubr.bf16.mxu0 0
    %803 = vmatmul.mubr.bf16.gmra.mxu0 %v768
    %v804 = vpop.f32.mrf.mxu0
    %v805 = vadd.f32 %v309, %v804
    %v806 = vpop.f32.mrf.mxu0
    %v807 = vpop.f32.mrf.mxu0
    %v808 = vpop.f32.mrf.mxu0
    %809 = vdwg.mxu0
    %v810 = vxor.u32 %v805, 2147483648
    %v811 = vmul.f32 %v810, 1.442695
    %v812 = vpow.pop %v811
    %v813 = vadd.f32 %v812, 1.0
    %v814 = vrcp.pop %v813
    %v815 = vmul.f32 1.0, %v814
    %v816 = vtanh.pop %v805
    %v817 = vmul.f32 %v815, %v683
    %819 = vrot.lane.b32.xlu0 %v816, 32
    %v820 = vpop.permute.xlu0 %819
    %v822 = vmul.f32 %v815, %v820
    %824 = vrot.lane.b32.xlu0 %v822, 32
    %v825 = vpop.permute.xlu0 %824
    %v827 = vadd.f32 %v817, %v825
    %v828 = vtanh.pop %v827
    %830 = vrot.lane.b32.xlu0 %v828, 32
    %v831 = vpop.permute.xlu0 %830
    %v833 = vmul.f32 %v815, %v831
    %v834 = vpack.c.bf16 %v761, %v761
    %836 = vrot.lane.b32.xlu0 %v834, 64
    %v837 = vpop.permute.xlu0 %836
    %v839 = vsel %vm163, %v837, 0
    %841 = vmatprep.subr.bf16.mxu0 0
    %842 = vmatpush1.bf16.msra.mxu0 0
    %843 = vmatprep.subr.bf16.mxu0 0
    %844 = vmatpush1.bf16.msra.mxu0 0
    %845 = vmatprep.subr.bf16.mxu0 0
    %846 = vmatpush1.bf16.msra.mxu0 0
    %847 = vmatprep.subr.bf16.mxu0 0
    %848 = vmatpush1.bf16.msra.mxu0 0
    %849 = vmatprep.subr.bf16.mxu0 0
    %850 = vmatpush1.bf16.msra.mxu0 0
    %851 = vmatprep.subr.bf16.mxu0 0
    %852 = vmatpush1.bf16.msra.mxu0 0
    %853 = vmatprep.subr.bf16.mxu0 0
    %854 = vmatpush1.bf16.msra.mxu0 %v160
    %855 = vmatprep.subr.bf16.mxu0 0
    %856 = vmatpush1.bf16.msra.mxu0 %v159
    %857 = vmatprep.subr.bf16.mxu0 0
    %858 = vmatpush2.bf16.msra.mxu0 0
    %859 = vmatprep.subr.bf16.mxu0 0
    %860 = vmatpush2.bf16.msra.mxu0 0
    %861 = vmatprep.subr.bf16.mxu0 0
    %862 = vmatpush2.bf16.msra.mxu0 0
    %863 = vmatprep.subr.bf16.mxu0 0
    %864 = vmatpush2.bf16.msra.mxu0 0
    %865 = vmatprep.subr.bf16.mxu0 0
    %866 = vmatpush2.bf16.msra.mxu0 0
    %867 = vmatprep.subr.bf16.mxu0 0
    %868 = vmatpush2.bf16.msra.mxu0 0
    %869 = vmatprep.subr.bf16.mxu0 0
    %870 = vmatpush2.bf16.msra.mxu0 0
    %871 = vmatprep.subr.bf16.mxu0 0
    %872 = vmatpush2.bf16.msra.mxu0 0
    %873 = vmatprep.mubr.bf16.mxu0 0
    %874 = vmatmul.mubr.bf16.gmra.mxu0 %v839
    %v875 = vpop.f32.mrf.mxu0
    %v876 = vadd.f32 0.0, %v875
    %v877 = vpop.f32.mrf.mxu0
    %v878 = vpop.f32.mrf.mxu0
    %v879 = vpop.f32.mrf.mxu0
    %880 = vdwg.mxu0
    %v881 = vadd.f32 %v140, %v876
    %v882 = vxor.u32 %v881, 2147483648
    %v883 = vmul.f32 %v882, 1.442695
    %v884 = vpow.pop %v883
    %v885 = vadd.f32 %v884, 1.0
    %v886 = vrcp.pop %v885
    %v887 = vmul.f32 1.0, %v886
    %v888 = vtanh.pop %v881
    %v889 = vmul.f32 %v887, %v755
    %891 = vrot.lane.b32.xlu0 %v888, 32
    %v892 = vpop.permute.xlu0 %891
    %v894 = vmul.f32 %v887, %v892
    %896 = vrot.lane.b32.xlu0 %v894, 32
    %v897 = vpop.permute.xlu0 %896
    %v899 = vadd.f32 %v889, %v897
    %v900 = vtanh.pop %v899
    %902 = vrot.lane.b32.xlu0 %v900, 32
    %v903 = vpop.permute.xlu0 %902
    %v905 = vmul.f32 %v887, %v903
    %v906 = vpack.c.bf16 %v833, %v833
    %908 = vrot.lane.b32.xlu0 %v906, 96
    %v909 = vpop.permute.xlu0 %908
    %v911 = vsel %vm163, %v837, %v909
    %v912 = vsel %vm335, %v911, 0
    %914 = vmatprep.subr.bf16.mxu0 0
    %915 = vmatpush1.bf16.msra.mxu0 0
    %916 = vmatprep.subr.bf16.mxu0 0
    %917 = vmatpush1.bf16.msra.mxu0 0
    %918 = vmatprep.subr.bf16.mxu0 0
    %919 = vmatpush1.bf16.msra.mxu0 0
    %920 = vmatprep.subr.bf16.mxu0 0
    %921 = vmatpush1.bf16.msra.mxu0 0
    %922 = vmatprep.subr.bf16.mxu0 0
    %923 = vmatpush1.bf16.msra.mxu0 %v330
    %924 = vmatprep.subr.bf16.mxu0 0
    %925 = vmatpush1.bf16.msra.mxu0 %v329
    %926 = vmatprep.subr.bf16.mxu0 0
    %927 = vmatpush1.bf16.msra.mxu0 %v328
    %928 = vmatprep.subr.bf16.mxu0 0
    %929 = vmatpush1.bf16.msra.mxu0 %v327
    %930 = vmatprep.subr.bf16.mxu0 0
    %931 = vmatpush2.bf16.msra.mxu0 0
    %932 = vmatprep.subr.bf16.mxu0 0
    %933 = vmatpush2.bf16.msra.mxu0 0
    %934 = vmatprep.subr.bf16.mxu0 0
    %935 = vmatpush2.bf16.msra.mxu0 0
    %936 = vmatprep.subr.bf16.mxu0 0
    %937 = vmatpush2.bf16.msra.mxu0 0
    %938 = vmatprep.subr.bf16.mxu0 0
    %939 = vmatpush2.bf16.msra.mxu0 0
    %940 = vmatprep.subr.bf16.mxu0 0
    %941 = vmatpush2.bf16.msra.mxu0 0
    %942 = vmatprep.subr.bf16.mxu0 0
    %943 = vmatpush2.bf16.msra.mxu0 0
    %944 = vmatprep.subr.bf16.mxu0 0
    %945 = vmatpush2.bf16.msra.mxu0 0
    %946 = vmatprep.mubr.bf16.mxu0 0
    %947 = vmatmul.mubr.bf16.gmra.mxu0 %v912
    %v948 = vpop.f32.mrf.mxu0
    %v949 = vadd.f32 %v309, %v948
    %v950 = vpop.f32.mrf.mxu0
    %v951 = vpop.f32.mrf.mxu0
    %v952 = vpop.f32.mrf.mxu0
    %953 = vdwg.mxu0
    %v954 = vxor.u32 %v949, 2147483648
    %v955 = vmul.f32 %v954, 1.442695
    %v956 = vpow.pop %v955
    %v957 = vadd.f32 %v956, 1.0
    %v958 = vrcp.pop %v957
    %v959 = vmul.f32 1.0, %v958
    %v960 = vtanh.pop %v949
    %v961 = vmul.f32 %v959, %v827
    %963 = vrot.lane.b32.xlu0 %v960, 32
    %v964 = vpop.permute.xlu0 %963
    %v966 = vmul.f32 %v959, %v964
    %968 = vrot.lane.b32.xlu0 %v966, 32
    %v969 = vpop.permute.xlu0 %968
    %v971 = vadd.f32 %v961, %v969
    %v972 = vtanh.pop %v971
    %974 = vrot.lane.b32.xlu0 %v972, 32
    %v975 = vpop.permute.xlu0 %974
    %v977 = vmul.f32 %v959, %v975
    %v978 = vpack.c.bf16 %v905, %v905
    %980 = vrot.lane.b32.xlu0 %v978, 64
    %v981 = vpop.permute.xlu0 %980
    %v983 = vsel %vm163, %v981, 0
    %985 = vmatprep.subr.bf16.mxu0 0
    %986 = vmatpush1.bf16.msra.mxu0 0
    %987 = vmatprep.subr.bf16.mxu0 0
    %988 = vmatpush1.bf16.msra.mxu0 0
    %989 = vmatprep.subr.bf16.mxu0 0
    %990 = vmatpush1.bf16.msra.mxu0 0
    %991 = vmatprep.subr.bf16.mxu0 0
    %992 = vmatpush1.bf16.msra.mxu0 0
    %993 = vmatprep.subr.bf16.mxu0 0
    %994 = vmatpush1.bf16.msra.mxu0 0
    %995 = vmatprep.subr.bf16.mxu0 0
    %996 = vmatpush1.bf16.msra.mxu0 0
    %997 = vmatprep.subr.bf16.mxu0 0
    %998 = vmatpush1.bf16.msra.mxu0 %v160
    %999 = vmatprep.subr.bf16.mxu0 0
    %1000 = vmatpush1.bf16.msra.mxu0 %v159
    %1001 = vmatprep.subr.bf16.mxu0 0
    %1002 = vmatpush2.bf16.msra.mxu0 0
    %1003 = vmatprep.subr.bf16.mxu0 0
    %1004 = vmatpush2.bf16.msra.mxu0 0
    %1005 = vmatprep.subr.bf16.mxu0 0
    %1006 = vmatpush2.bf16.msra.mxu0 0
    %1007 = vmatprep.subr.bf16.mxu0 0
    %1008 = vmatpush2.bf16.msra.mxu0 0
    %1009 = vmatprep.subr.bf16.mxu0 0
    %1010 = vmatpush2.bf16.msra.mxu0 0
    %1011 = vmatprep.subr.bf16.mxu0 0
    %1012 = vmatpush2.bf16.msra.mxu0 0
    %1013 = vmatprep.subr.bf16.mxu0 0
    %1014 = vmatpush2.bf16.msra.mxu0 0
    %1015 = vmatprep.subr.bf16.mxu0 0
    %1016 = vmatpush2.bf16.msra.mxu0 0
    %1017 = vmatprep.mubr.bf16.mxu0 0
    %1018 = vmatmul.mubr.bf16.gmra.mxu0 %v983
    %v1019 = vpop.f32.mrf.mxu0
    %v1020 = vadd.f32 0.0, %v1019
    %v1021 = vpop.f32.mrf.mxu0
    %v1022 = vpop.f32.mrf.mxu0
    %v1023 = vpop.f32.mrf.mxu0
    %1024 = vdwg.mxu0
    %v1025 = vadd.f32 %v145, %v1020
    %v1026 = vxor.u32 %v1025, 2147483648
    %v1027 = vmul.f32 %v1026, 1.442695
    %v1028 = vpow.pop %v1027
    %v1029 = vadd.f32 %v1028, 1.0
    %v1030 = vrcp.pop %v1029
    %v1031 = vmul.f32 1.0, %v1030
    %v1032 = vtanh.pop %v1025
    %v1033 = vmul.f32 %v1031, %v899
    %1035 = vrot.lane.b32.xlu0 %v1032, 32
    %v1036 = vpop.permute.xlu0 %1035
    %v1038 = vmul.f32 %v1031, %v1036
    %1040 = vrot.lane.b32.xlu0 %v1038, 32
    %v1041 = vpop.permute.xlu0 %1040
    %v1043 = vadd.f32 %v1033, %v1041
    %v1044 = vtanh.pop %v1043
    %1046 = vrot.lane.b32.xlu0 %v1044, 32
    %v1047 = vpop.permute.xlu0 %1046
    %v1049 = vmul.f32 %v1031, %v1047
    %v1050 = vpack.c.bf16 %v977, %v977
    %1052 = vrot.lane.b32.xlu0 %v1050, 96
    %v1053 = vpop.permute.xlu0 %1052
    %v1055 = vsel %vm163, %v981, %v1053
    %v1056 = vsel %vm335, %v1055, 0
    %1058 = vmatprep.subr.bf16.mxu0 0
    %1059 = vmatpush1.bf16.msra.mxu0 0
    %1060 = vmatprep.subr.bf16.mxu0 0
    %1061 = vmatpush1.bf16.msra.mxu0 0
    %1062 = vmatprep.subr.bf16.mxu0 0
    %1063 = vmatpush1.bf16.msra.mxu0 0
    %1064 = vmatprep.subr.bf16.mxu0 0
    %1065 = vmatpush1.bf16.msra.mxu0 0
    %1066 = vmatprep.subr.bf16.mxu0 0
    %1067 = vmatpush1.bf16.msra.mxu0 %v330
    %1068 = vmatprep.subr.bf16.mxu0 0
    %1069 = vmatpush1.bf16.msra.mxu0 %v329
    %1070 = vmatprep.subr.bf16.mxu0 0
    %1071 = vmatpush1.bf16.msra.mxu0 %v328
    %1072 = vmatprep.subr.bf16.mxu0 0
    %1073 = vmatpush1.bf16.msra.mxu0 %v327
    %1074 = vmatprep.subr.bf16.mxu0 0
    %1075 = vmatpush2.bf16.msra.mxu0 0
    %1076 = vmatprep.subr.bf16.mxu0 0
    %1077 = vmatpush2.bf16.msra.mxu0 0
    %1078 = vmatprep.subr.bf16.mxu0 0
    %1079 = vmatpush2.bf16.msra.mxu0 0
    %1080 = vmatprep.subr.bf16.mxu0 0
    %1081 = vmatpush2.bf16.msra.mxu0 0
    %1082 = vmatprep.subr.bf16.mxu0 0
    %1083 = vmatpush2.bf16.msra.mxu0 0
    %1084 = vmatprep.subr.bf16.mxu0 0
    %1085 = vmatpush2.bf16.msra.mxu0 0
    %1086 = vmatprep.subr.bf16.mxu0 0
    %1087 = vmatpush2.bf16.msra.mxu0 0
    %1088 = vmatprep.subr.bf16.mxu0 0
    %1089 = vmatpush2.bf16.msra.mxu0 0
    %1090 = vmatprep.mubr.bf16.mxu0 0
    %1091 = vmatmul.mubr.bf16.gmra.mxu0 %v1056
    %v1092 = vpop.f32.mrf.mxu0
    %v1093 = vadd.f32 %v309, %v1092
    %v1094 = vpop.f32.mrf.mxu0
    %v1095 = vpop.f32.mrf.mxu0
    %v1096 = vpop.f32.mrf.mxu0
    %1097 = vdwg.mxu0
    %v1098 = vxor.u32 %v1093, 2147483648
    %v1099 = vmul.f32 %v1098, 1.442695
    %v1100 = vpow.pop %v1099
    %v1101 = vadd.f32 %v1100, 1.0
    %v1102 = vrcp.pop %v1101
    %v1103 = vmul.f32 1.0, %v1102
    %v1104 = vtanh.pop %v1093
    %v1105 = vmul.f32 %v1103, %v971
    %1107 = vrot.lane.b32.xlu0 %v1104, 32
    %v1108 = vpop.permute.xlu0 %1107
    %v1110 = vmul.f32 %v1103, %v1108
    %1112 = vrot.lane.b32.xlu0 %v1110, 32
    %v1113 = vpop.permute.xlu0 %1112
    %v1115 = vadd.f32 %v1105, %v1113
    %v1116 = vtanh.pop %v1115
    %1118 = vrot.lane.b32.xlu0 %v1116, 32
    %v1119 = vpop.permute.xlu0 %1118
    %v1121 = vmul.f32 %v1103, %v1119
    %v1122 = vpack.c.bf16 %v1049, %v1049
    %1124 = vrot.lane.b32.xlu0 %v1122, 64
    %v1125 = vpop.permute.xlu0 %1124
    %v1127 = vsel %vm163, %v1125, 0
    %1129 = vmatprep.subr.bf16.mxu0 0
    %1130 = vmatpush1.bf16.msra.mxu0 0
    %1131 = vmatprep.subr.bf16.mxu0 0
    %1132 = vmatpush1.bf16.msra.mxu0 0
    %1133 = vmatprep.subr.bf16.mxu0 0
    %1134 = vmatpush1.bf16.msra.mxu0 0
    %1135 = vmatprep.subr.bf16.mxu0 0
    %1136 = vmatpush1.bf16.msra.mxu0 0
    %1137 = vmatprep.subr.bf16.mxu0 0
    %1138 = vmatpush1.bf16.msra.mxu0 0
    %1139 = vmatprep.subr.bf16.mxu0 0
    %1140 = vmatpush1.bf16.msra.mxu0 0
    %1141 = vmatprep.subr.bf16.mxu0 0
    %1142 = vmatpush1.bf16.msra.mxu0 %v160
    %1143 = vmatprep.subr.bf16.mxu0 0
    %1144 = vmatpush1.bf16.msra.mxu0 %v159
    %1145 = vmatprep.subr.bf16.mxu0 0
    %1146 = vmatpush2.bf16.msra.mxu0 0
    %1147 = vmatprep.subr.bf16.mxu0 0
    %1148 = vmatpush2.bf16.msra.mxu0 0
    %1149 = vmatprep.subr.bf16.mxu0 0
    %1150 = vmatpush2.bf16.msra.mxu0 0
    %1151 = vmatprep.subr.bf16.mxu0 0
    %1152 = vmatpush2.bf16.msra.mxu0 0
    %1153 = vmatprep.subr.bf16.mxu0 0
    %1154 = vmatpush2.bf16.msra.mxu0 0
    %1155 = vmatprep.subr.bf16.mxu0 0
    %1156 = vmatpush2.bf16.msra.mxu0 0
    %1157 = vmatprep.subr.bf16.mxu0 0
    %1158 = vmatpush2.bf16.msra.mxu0 0
    %1159 = vmatprep.subr.bf16.mxu0 0
    %1160 = vmatpush2.bf16.msra.mxu0 0
    %1161 = vmatprep.mubr.bf16.mxu0 0
    %1162 = vmatmul.mubr.bf16.gmra.mxu0 %v1127
    %v1163 = vpop.f32.mrf.mxu0
    %v1164 = vadd.f32 0.0, %v1163
    %v1165 = vpop.f32.mrf.mxu0
    %v1166 = vpop.f32.mrf.mxu0
    %v1167 = vpop.f32.mrf.mxu0
    %1168 = vdwg.mxu0
    %v1169 = vadd.f32 %v148, %v1164
    %v1170 = vxor.u32 %v1169, 2147483648
    %v1171 = vmul.f32 %v1170, 1.442695
    %v1172 = vpow.pop %v1171
    %v1173 = vadd.f32 %v1172, 1.0
    %v1174 = vrcp.pop %v1173
    %v1175 = vmul.f32 1.0, %v1174
    %v1176 = vtanh.pop %v1169
    %v1177 = vmul.f32 %v1175, %v1043
    %1179 = vrot.lane.b32.xlu0 %v1176, 32
    %v1180 = vpop.permute.xlu0 %1179
    %v1182 = vmul.f32 %v1175, %v1180
    %1184 = vrot.lane.b32.xlu0 %v1182, 32
    %v1185 = vpop.permute.xlu0 %1184
    %v1187 = vadd.f32 %v1177, %v1185
    %v1188 = vtanh.pop %v1187
    %1190 = vrot.lane.b32.xlu0 %v1188, 32
    %v1191 = vpop.permute.xlu0 %1190
    %v1193 = vmul.f32 %v1175, %v1191
    %v1194 = vpack.c.bf16 %v1121, %v1121
    %1196 = vrot.lane.b32.xlu0 %v1194, 96
    %v1197 = vpop.permute.xlu0 %1196
    %v1199 = vsel %vm163, %v1125, %v1197
    %v1200 = vsel %vm335, %v1199, 0
    %1202 = vmatprep.subr.bf16.mxu0 0
    %1203 = vmatpush1.bf16.msra.mxu0 0
    %1204 = vmatprep.subr.bf16.mxu0 0
    %1205 = vmatpush1.bf16.msra.mxu0 0
    %1206 = vmatprep.subr.bf16.mxu0 0
    %1207 = vmatpush1.bf16.msra.mxu0 0
    %1208 = vmatprep.subr.bf16.mxu0 0
    %1209 = vmatpush1.bf16.msra.mxu0 0
    %1210 = vmatprep.subr.bf16.mxu0 0
    %1211 = vmatpush1.bf16.msra.mxu0 %v330
    %1212 = vmatprep.subr.bf16.mxu0 0
    %1213 = vmatpush1.bf16.msra.mxu0 %v329
    %1214 = vmatprep.subr.bf16.mxu0 0
    %1215 = vmatpush1.bf16.msra.mxu0 %v328
    %1216 = vmatprep.subr.bf16.mxu0 0
    %1217 = vmatpush1.bf16.msra.mxu0 %v327
    %1218 = vmatprep.subr.bf16.mxu0 0
    %1219 = vmatpush2.bf16.msra.mxu0 0
    %1220 = vmatprep.subr.bf16.mxu0 0
    %1221 = vmatpush2.bf16.msra.mxu0 0
    %1222 = vmatprep.subr.bf16.mxu0 0
    %1223 = vmatpush2.bf16.msra.mxu0 0
    %1224 = vmatprep.subr.bf16.mxu0 0
    %1225 = vmatpush2.bf16.msra.mxu0 0
    %1226 = vmatprep.subr.bf16.mxu0 0
    %1227 = vmatpush2.bf16.msra.mxu0 0
    %1228 = vmatprep.subr.bf16.mxu0 0
    %1229 = vmatpush2.bf16.msra.mxu0 0
    %1230 = vmatprep.subr.bf16.mxu0 0
    %1231 = vmatpush2.bf16.msra.mxu0 0
    %1232 = vmatprep.subr.bf16.mxu0 0
    %1233 = vmatpush2.bf16.msra.mxu0 0
    %1234 = vmatprep.mubr.bf16.mxu0 0
    %1235 = vmatmul.mubr.bf16.gmra.mxu0 %v1200
    %v1236 = vpop.f32.mrf.mxu0
    %v1237 = vadd.f32 %v309, %v1236
    %v1238 = vpop.f32.mrf.mxu0
    %v1239 = vpop.f32.mrf.mxu0
    %v1240 = vpop.f32.mrf.mxu0
    %1241 = vdwg.mxu0
    %v1242 = vxor.u32 %v1237, 2147483648
    %v1243 = vmul.f32 %v1242, 1.442695
    %v1244 = vpow.pop %v1243
    %v1245 = vadd.f32 %v1244, 1.0
    %v1246 = vrcp.pop %v1245
    %v1247 = vmul.f32 1.0, %v1246
    %v1248 = vtanh.pop %v1237
    %v1249 = vmul.f32 %v1247, %v1115
    %1251 = vrot.lane.b32.xlu0 %v1248, 32
    %v1252 = vpop.permute.xlu0 %1251
    %v1254 = vmul.f32 %v1247, %v1252
    %1256 = vrot.lane.b32.xlu0 %v1254, 32
    %v1257 = vpop.permute.xlu0 %1256
    %v1259 = vadd.f32 %v1249, %v1257
    %v1260 = vtanh.pop %v1259
    %1262 = vrot.lane.b32.xlu0 %v1260, 32
    %v1263 = vpop.permute.xlu0 %1262
    %v1265 = vmul.f32 %v1247, %v1263
    %v1266 = vpack.c.bf16 %v1193, %v1193
    %v1267 = vpack.c.bf16 %v1265, %v1265
    %1269 = vrot.lane.b32.xlu0 %v1266, 64
    %v1270 = vpop.permute.xlu0 %1269
    %1272 = vrot.lane.b32.xlu0 %v1267, 96
    %v1273 = vpop.permute.xlu0 %1272
    %v1276 = vsel %vm163, %v1270, %v1273
    %v1277 = vsel %vm335, %v1276, 0
    %1279 = vmatprep.subr.bf16.mxu0 0
    %1280 = vmatpush1.bf16.msra.mxu0 0
    %1281 = vmatprep.subr.bf16.mxu0 0
    %1282 = vmatpush1.bf16.msra.mxu0 0
    %1283 = vmatprep.subr.bf16.mxu0 0
    %1284 = vmatpush1.bf16.msra.mxu0 0
    %1285 = vmatprep.subr.bf16.mxu0 0
    %1286 = vmatpush1.bf16.msra.mxu0 0
    %1287 = vmatprep.subr.bf16.mxu0 0
    %1288 = vmatpush1.bf16.msra.mxu0 %v330
    %1289 = vmatprep.subr.bf16.mxu0 0
    %1290 = vmatpush1.bf16.msra.mxu0 %v329
    %1291 = vmatprep.subr.bf16.mxu0 0
    %1292 = vmatpush1.bf16.msra.mxu0 %v328
    %1293 = vmatprep.subr.bf16.mxu0 0
    %1294 = vmatpush1.bf16.msra.mxu0 %v327
    %1295 = vmatprep.subr.bf16.mxu0 0
    %1296 = vmatpush2.bf16.msra.mxu0 0
    %1297 = vmatprep.subr.bf16.mxu0 0
    %1298 = vmatpush2.bf16.msra.mxu0 0
    %1299 = vmatprep.subr.bf16.mxu0 0
    %1300 = vmatpush2.bf16.msra.mxu0 0
    %1301 = vmatprep.subr.bf16.mxu0 0
    %1302 = vmatpush2.bf16.msra.mxu0 0
    %1303 = vmatprep.subr.bf16.mxu0 0
    %1304 = vmatpush2.bf16.msra.mxu0 0
    %1305 = vmatprep.subr.bf16.mxu0 0
    %1306 = vmatpush2.bf16.msra.mxu0 0
    %1307 = vmatprep.subr.bf16.mxu0 0
    %1308 = vmatpush2.bf16.msra.mxu0 0
    %1309 = vmatprep.subr.bf16.mxu0 0
    %1310 = vmatpush2.bf16.msra.mxu0 0
    %1311 = vmatprep.mubr.bf16.mxu0 0
    %1312 = vmatmul.mubr.bf16.gmra.mxu0 %v1277
    %v1313 = vpop.f32.mrf.mxu0
    %v1314 = vadd.f32 %v309, %v1313
    %v1315 = vpop.f32.mrf.mxu0
    %v1316 = vpop.f32.mrf.mxu0
    %v1317 = vpop.f32.mrf.mxu0
    %1318 = vdwg.mxu0
    %v1319 = vxor.u32 %v1314, 2147483648
    %v1320 = vmul.f32 %v1319, 1.442695
    %v1321 = vpow.pop %v1320
    %v1322 = vadd.f32 %v1321, 1.0
    %v1323 = vrcp.pop %v1322
    %v1324 = vmul.f32 1.0, %v1323
    %v1325 = vtanh.pop %v1314
    %v1326 = vmul.f32 %v1324, %v1259
    %1328 = vrot.lane.b32.xlu0 %v1325, 32
    %v1329 = vpop.permute.xlu0 %1328
    %v1331 = vmul.f32 %v1324, %v1329
    %1333 = vrot.lane.b32.xlu0 %v1331, 32
    %v1334 = vpop.permute.xlu0 %1333
    %v1336 = vadd.f32 %v1326, %v1334
    %v1337 = vtanh.pop %v1336
    %1339 = vrot.lane.b32.xlu0 %v1337, 32
    %v1340 = vpop.permute.xlu0 %1339
    %v1342 = vmul.f32 %v1324, %v1340
    %v1343 = vpack.c.bf16 %v1342, %v1342
    %v1345 = vlaneseq
    %v1346 = vshrl.u32 %v1345, 7
    %v1347 = vsub.s32 0, %v1346
    %v1348 = vrot.slane %v50, %v1347
    %1351 = vrot.lane.b32.xlu0 %v1343, 64
    %v1352 = vpop.permute.xlu0 %1351
    %v1357 = vunpack.c.l.b16 %v46
    %v1358 = vunpack.c.l.b16 %v47
    %v1359 = vunpack.c.l.b16 %v48
    %v1360 = vunpack.c.l.b16 %v49
    %v1361 = vpack.c.b16 %v1358, %v1357
    %v1362 = vpack.c.b16 %v1360, %v1359
    %v1366 = vsel %vm163, %v1352, 0
    %1368 = vmatprep.subr.bf16.mxu0 0
    %1369 = vmatpush1.bf16.msra.mxu0 0
    %1370 = vmatprep.subr.bf16.mxu0 0
    %1371 = vmatpush1.bf16.msra.mxu0 0
    %1372 = vmatprep.subr.bf16.mxu0 0
    %1373 = vmatpush1.bf16.msra.mxu0 0
    %1374 = vmatprep.subr.bf16.mxu0 0
    %1375 = vmatpush1.bf16.msra.mxu0 0
    %1376 = vmatprep.subr.bf16.mxu0 0
    %1377 = vmatpush1.bf16.msra.mxu0 0
    %1378 = vmatprep.subr.bf16.mxu0 0
    %1379 = vmatpush1.bf16.msra.mxu0 0
    %1380 = vmatprep.subr.bf16.mxu0 0
    %1381 = vmatpush1.bf16.msra.mxu0 %v1362
    %1382 = vmatprep.subr.bf16.mxu0 0
    %1383 = vmatpush1.bf16.msra.mxu0 %v1361
    %1384 = vmatprep.subr.bf16.mxu0 0
    %1385 = vmatpush2.bf16.msra.mxu0 0
    %1386 = vmatprep.subr.bf16.mxu0 0
    %1387 = vmatpush2.bf16.msra.mxu0 0
    %1388 = vmatprep.subr.bf16.mxu0 0
    %1389 = vmatpush2.bf16.msra.mxu0 0
    %1390 = vmatprep.subr.bf16.mxu0 0
    %1391 = vmatpush2.bf16.msra.mxu0 0
    %1392 = vmatprep.subr.bf16.mxu0 0
    %1393 = vmatpush2.bf16.msra.mxu0 0
    %1394 = vmatprep.subr.bf16.mxu0 0
    %1395 = vmatpush2.bf16.msra.mxu0 0
    %1396 = vmatprep.subr.bf16.mxu0 0
    %1397 = vmatpush2.bf16.msra.mxu0 0
    %1398 = vmatprep.subr.bf16.mxu0 0
    %1399 = vmatpush2.bf16.msra.mxu0 0
    %1400 = vmatprep.mubr.bf16.mxu0 0
    %1401 = vmatmul.mubr.bf16.gmra.mxu0 %v1366
    %v1402 = vpop.f32.mrf.mxu0
    %v1403 = vadd.f32 %v1348, %v1402
    %v1404 = vpop.f32.mrf.mxu0
    %v1405 = vpop.f32.mrf.mxu0
    %v1406 = vpop.f32.mrf.mxu0
    %1407 = vdwg.mxu0
    %1408 = vst [vmem:[#allocation2] sm:$0xff] %v1403
    // Predicated region
    $region34: #{tpu_custom_call.1} parent=1 // pred_check
      _
    $region35: #{tpu_custom_call.1} parent=1 // pred_check_branch
      %1410 = sbr.rel (0) target = $region37
    $region36: #{tpu_custom_call.1} parent=1 // pred_region
      %s1412 = ssub.s32 128, 128
      %1413 = vsyncadd [#allocation3], %s1412
      %s1415 = sshll.u32 [#allocation2], 4
      %s1416 = int_to_ptr.vmem [resolvable:$true] %s1415
      %1418 = dma.vmem_to_hbm [thread:$0]  %s1416, 128, %s8, [#allocation3]
    $region37: #{tpu_custom_call.1} parent=1 // pred_fallthru
      _
    // Predicated region
    $region38: #{tpu_custom_call.1} parent=1 // pred_check
      _
    $region39: #{tpu_custom_call.1} parent=1 // pred_check_branch
      %1420 = sbr.rel (0) target = $region41
    $region40: #{tpu_custom_call.1} parent=1 // pred_region
      %1421 = dma.done [#allocation3], 128
    $region41: #{tpu_custom_call.1} parent=1 // pred_fallthru
      _
    %1422 = vsyncpa [#allocation3], 1

</llo_original>
